<compile_context>
chip_gen: v7x
topology: tpu7x:2x2x1
jax: 0.10.0
libtpu: 0.0.40
codegen_flags: <defaults>
</compile_context>

<pallas_src>
import functools

import jax
import jax.numpy as jnp
import numpy as np
from jax.experimental import pallas as pl
from jax.experimental.pallas import tpu as pltpu


def _round_up(x, m):
    return ((x + m - 1) // m) * m


def _reorder_pad_gate_rows(w, H, Hp):
    """(4H, ...) in PyTorch gate order (i, f, g, o) -> (4Hp, ...) in order (i, f, o, g)."""
    i, f, g, o = w[0:H], w[H:2 * H], w[2 * H:3 * H], w[3 * H:4 * H]
    pad_cfg = ((0, Hp - H),) + ((0, 0),) * (w.ndim - 1)
    pad = lambda a: jnp.pad(a, pad_cfg)
    return jnp.concatenate([pad(i), pad(f), pad(o), pad(g)], axis=0)


def lstm_last_kernel(pre_ref, lens_ref, b_ref, whh_ref, wout_ref, out_ref,
                     h_sc, c_sc, hlast_sc, *, gate_dtype):
    t_chunk = pl.program_id(1)
    T = pre_ref.shape[0]
    Hp = h_sc.shape[1]

    @pl.when(t_chunk == 0)
    def _():
        h_sc[...] = jnp.zeros_like(h_sc)
        c_sc[...] = jnp.zeros_like(c_sc)
        hlast_sc[...] = jnp.zeros_like(hlast_sc)

    lens = lens_ref[...]                        # (TB, 1) int32, resident
    bias = b_ref[...].astype(jnp.float32)       # (1, 4Hp) f32, hoisted out of the loop
    whh = whh_ref[...]                          # (Hp, 4Hp) compute dtype, hoisted out of the loop
    t0 = t_chunk * T

    def step(tt, carry):
        # Only (h, c) are carried; hlast lives in VMEM scratch and is updated in place.
        h, c = carry                                       # h: compute dtype, c: f32, (TB, Hp)
        pre = pre_ref[tt].astype(jnp.float32)              # (TB, 4Hp) x-projection
        gates = pre + bias + jnp.dot(h, whh, preferred_element_type=jnp.float32)
        gates = gates.astype(gate_dtype)                   # bf16 on v6e/v7x, f32 on v5e
        # gate order (i, f, o, g): one wide sigmoid slab + one tanh slab (lane-aligned, Hp%128==0)
        sg = 0.5 * jnp.tanh(0.5 * gates[:, :3 * Hp]) + 0.5   # sigmoid via tanh: 1 EUP op
        g_g = jnp.tanh(gates[:, 3 * Hp:])
        i_g = sg[:, 0:Hp]
        f_g = sg[:, Hp:2 * Hp]
        o_g = sg[:, 2 * Hp:3 * Hp]
        c_new = f_g * c + i_g * g_g                        # promotes to f32 (c stays f32)
        h_new = (o_g * jnp.tanh(c_new.astype(gate_dtype))).astype(h.dtype)
        # capture h at the last *valid* timestep of each sequence (in-place, not in the carry)
        is_last = lens == (t0 + tt + 1)                    # (TB, 1), broadcasts over Hp
        hlast_sc[...] = jnp.where(is_last, h_new, hlast_sc[...])
        return h_new, c_new

    h, c = jax.lax.fori_loop(0, T, step, (h_sc[...], c_sc[...]), unroll=True)
    h_sc[...] = h
    c_sc[...] = c

    @pl.when(t_chunk == pl.num_programs(1) - 1)
    def _():
        out_ref[...] = jnp.dot(hlast_sc[...], wout_ref[...],
                               preferred_element_type=jnp.float32).astype(out_ref.dtype)


def lstm_bptt_char_last_timestep(x, lengths, params, *,
                                 compute_dtype=jnp.float32,   # bf16 recommended on real TPU HW
                                 gate_dtype=None,             # bf16 on v6e/v7x; keep f32 on v5e
                                 time_block=32,               # sweep {16, 32, 64}
                                 max_batch_block=128,         # sweep {64, 128}
                                 min_batch_tiles=1,           # set >=2 on v7x for megacore
                                 vmem_limit_bytes=40 * 1024 * 1024):
    """x: (B, S, I) float32 (batch_first), lengths: (B,) int32. Returns (B, O) float32."""
    B, S, I = x.shape
    w_ih, w_hh = params["w_ih"], params["w_hh"]       # (4H, I), (4H, H)
    b_ih, b_hh = params["b_ih"], params["b_hh"]       # (4H,), (4H,)
    w_out = params["w_out"]                           # (O, H)
    H = w_hh.shape[1]
    O = w_out.shape[0]

    cdt = np.dtype(compute_dtype)
    gdt = np.dtype(gate_dtype) if gate_dtype is not None else np.dtype(np.float32)
    csize = cdt.itemsize

    Hp = _round_up(H, 128)           # lane-aligned hidden; padded units stay exactly 0
    Op = _round_up(O, 128)           # lane-dense output (full vst, no masked partial stores)

    # Batch tile: at least `min_batch_tiles` tiles (v7x: 2 TCs), sublane multiple of 8.
    tiles = max(1, int(min_batch_tiles))
    TB = _round_up(max(1, -(-B // tiles)), 8)
    TB = max(8, min(TB, max_batch_block, _round_up(B, 8)))
    Bp = _round_up(B, TB)

    # Time chunk: start from time_block and shrink until the tiled working set fits the
    # VMEM budget (double-buffered pre block + resident weights + state + output).
    def _vmem_estimate(T_):
        pre_b = 2 * T_ * TB * 4 * Hp * csize                       # double-buffered pre chunk
        w_b = 2 * ((Hp * 4 * Hp + Hp * Op) * csize + 4 * Hp * 4 + TB * 4)
        st_b = TB * Hp * (2 * csize + 4)                           # h, hlast (cdt) + c (f32)
        out_b = 2 * TB * Op * 4
        return pre_b + w_b + st_b + out_b

    T = max(1, min(time_block, S))
    budget = max(4 * 1024 * 1024, vmem_limit_bytes - (4 << 20))    # leave compiler headroom
    while T > 1 and _vmem_estimate(T) > budget:
        T = max(1, T // 2)
    Sp = _round_up(S, T)

    # gate order (i, f, o, g), each gate block zero-padded H -> Hp
    wih_r = _reorder_pad_gate_rows(w_ih, H, Hp)                         # (4Hp, I)
    whh_r = _reorder_pad_gate_rows(w_hh, H, Hp)                         # (4Hp, H)
    b_r = _reorder_pad_gate_rows(b_ih + b_hh, H, Hp)                    # (4Hp,)
    wih_t = jnp.transpose(wih_r).astype(cdt)                            # (I, 4Hp)
    whh_t = jnp.pad(jnp.transpose(whh_r), ((0, Hp - H), (0, 0))).astype(cdt)        # (Hp, 4Hp)
    wout_t = jnp.pad(jnp.transpose(w_out), ((0, Hp - H), (0, Op - O))).astype(cdt)  # (Hp, Op)
    bias = b_r.reshape(1, 4 * Hp).astype(jnp.float32)                   # added in-kernel

    # Hoisted input projection: pad the *small* x first, produce pre-gates directly time-major
    # and in compute_dtype (single HBM materialization of the (Sp, Bp, 4Hp) tensor).
    x_p = jnp.pad(x, ((0, Bp - B), (0, Sp - S), (0, 0))).astype(cdt)
    precision = jax.lax.Precision.HIGHEST if cdt == np.dtype(np.float32) else None
    pre = jnp.einsum('bsi,ig->sbg', x_p, wih_t,
                     preferred_element_type=jnp.float32,
                     precision=precision).astype(cdt)                   # (Sp, Bp, 4Hp)

    lens = jnp.pad(lengths.astype(jnp.int32), (0, Bp - B)).reshape(Bp, 1)

    kernel = functools.partial(lstm_last_kernel, gate_dtype=gdt)

    grid = (Bp // TB, Sp // T)       # (parallel batch tiles, sequential time chunks)
    out = pl.pallas_call(
        kernel,
        out_shape=jax.ShapeDtypeStruct((Bp, Op), jnp.float32),
        grid=grid,
        in_specs=[
            pl.BlockSpec((T, TB, 4 * Hp), lambda b, t: (t, b, 0)),   # pre-gates time chunk
            pl.BlockSpec((TB, 1), lambda b, t: (b, 0)),              # lengths (resident)
            pl.BlockSpec((1, 4 * Hp), lambda b, t: (0, 0)),          # bias (resident)
            pl.BlockSpec((Hp, 4 * Hp), lambda b, t: (0, 0)),         # W_hh^T (resident)
            pl.BlockSpec((Hp, Op), lambda b, t: (0, 0)),             # W_out^T (resident)
        ],
        out_specs=pl.BlockSpec((TB, Op), lambda b, t: (b, 0)),       # resident accumulator
        scratch_shapes=[
            pltpu.VMEM((TB, Hp), cdt),           # h (compute dtype: bf16 on v6e/v7x)
            pltpu.VMEM((TB, Hp), jnp.float32),   # c (always f32)
            pltpu.VMEM((TB, Hp), cdt),           # h at last valid timestep
        ],
        compiler_params=pltpu.CompilerParams(
            dimension_semantics=("parallel", "arbitrary"),
            vmem_limit_bytes=vmem_limit_bytes,
        ),
    )(pre, lens, bias, whh_t, wout_t)
    return out[:B, :O]


def reference(x, lengths, params):
    """Pure-JAX reference mirroring PyTorch LSTM + last-timestep + Linear(no bias)."""
    w_ih, w_hh = params["w_ih"], params["w_hh"]
    b_ih, b_hh = params["b_ih"], params["b_hh"]
    w_out = params["w_out"]
    H = w_hh.shape[1]
    B = x.shape[0]

    def step(carry, x_t):
        h, c = carry
        gates = x_t @ w_ih.T + h @ w_hh.T + b_ih + b_hh
        i = jax.nn.sigmoid(gates[:, 0 * H:1 * H])
        f = jax.nn.sigmoid(gates[:, 1 * H:2 * H])
        g = jnp.tanh(gates[:, 2 * H:3 * H])
        o = jax.nn.sigmoid(gates[:, 3 * H:4 * H])
        c = f * c + i * g
        h = o * jnp.tanh(c)
        return (h, c), h

    h0 = jnp.zeros((B, H), jnp.float32)
    c0 = jnp.zeros((B, H), jnp.float32)
    _, hs = jax.lax.scan(step, (h0, c0), jnp.transpose(x, (1, 0, 2)))
    hs = jnp.transpose(hs, (1, 0, 2))                          # (B, S, H)
    h_last = hs[jnp.arange(B), lengths - 1]                    # (B, H)
    return h_last @ w_out.T


if __name__ == "__main__":
    # small shapes consistent with the module's forward
    B, S, I, H, O = 2, 8, 16, 32, 8

    key = jax.random.PRNGKey(0)
    k = 1.0 / np.sqrt(H)
    keys = jax.random.split(key, 6)
    params = {
        "w_ih": jax.random.uniform(keys[0], (4 * H, I), jnp.float32, -k, k),
        "w_hh": jax.random.uniform(keys[1], (4 * H, H), jnp.float32, -k, k),
        "b_ih": jax.random.uniform(keys[2], (4 * H,), jnp.float32, -k, k),
        "b_hh": jax.random.uniform(keys[3], (4 * H,), jnp.float32, -k, k),
        "w_out": jax.random.uniform(keys[4], (O, H), jnp.float32, -k, k),
    }

    x = jax.random.normal(keys[5], (B, S, I), jnp.float32)     # (batch, seq, input)
    lengths = jnp.array([5, 8], dtype=jnp.int32)               # variable sequence lengths

    ref = jax.block_until_ready(reference(x, lengths, params))

    # Default (f32) compute path: runs on any backend, tight numeric check.
    # On real v6e/v7x hardware pass compute_dtype=jnp.bfloat16 (and gate_dtype=jnp.bfloat16)
    # for the MXU/EUP-native fast path.
    out = jax.block_until_ready(lstm_bptt_char_last_timestep(x, lengths, params))
    np.testing.assert_allclose(np.asarray(out), np.asarray(ref), rtol=2e-4, atol=2e-4)

    print("KERNEL_OK")
</pallas_src>

<mosaic_0001>
module attributes {stable_mosaic.version = 11 : i64} {
  func.func @lstm_last_kernel(%arg0: i32, %arg1: i32, %arg2: memref<8x8x512xf32, #tpu.memory_space<vmem>>, %arg3: memref<8x1xi32, #tpu.memory_space<vmem>>, %arg4: memref<1x512xf32, #tpu.memory_space<vmem>>, %arg5: memref<128x512xf32, #tpu.memory_space<vmem>>, %arg6: memref<128x128xf32, #tpu.memory_space<vmem>>, %arg7: memref<8x128xf32, #tpu.memory_space<vmem>>, %arg8: memref<8x128xf32, #tpu.memory_space<vmem>>, %arg9: memref<8x128xf32, #tpu.memory_space<vmem>>, %arg10: memref<8x128xf32, #tpu.memory_space<vmem>>) attributes {dimension_semantics = [#tpu.dimension_semantics<parallel>, #tpu.dimension_semantics<arbitrary>], iteration_bounds = array<i64: 1, 1>, scalar_prefetch = 0 : i64, scratch_operands = 3 : i64, tpu.core_type = #tpu.core_type<tc>, window_params = [{transform_indices = @transform_0, window_bounds = array<i64: 8, 8, 512>}, {transform_indices = @transform_1, window_bounds = array<i64: 8, 1>}, {pipeline_mode = #tpu.pipeline_mode<synchronous>, transform_indices = @transform_2, window_bounds = array<i64: 1, 512>}, {pipeline_mode = #tpu.pipeline_mode<synchronous>, transform_indices = @transform_3, window_bounds = array<i64: 128, 512>}, {pipeline_mode = #tpu.pipeline_mode<synchronous>, transform_indices = @transform_4, window_bounds = array<i64: 128, 128>}, {transform_indices = @transform_5, window_bounds = array<i64: 8, 128>}]} {
    %c0_i32 = arith.constant 0 : i32
    %0 = arith.cmpi eq, %arg1, %c0_i32 : i32
    %1 = arith.extui %0 : i1 to i32
    %c0_i32_0 = arith.constant 0 : i32
    %2 = arith.cmpi ne, %1, %c0_i32_0 : i32
    scf.if %2 {
      %cst_105 = arith.constant 0.000000e+00 : f32
      %286 = vector.broadcast %cst_105 : f32 to vector<8x128xf32>
      %c0_106 = arith.constant 0 : index
      %c0_107 = arith.constant 0 : index
      %287 = vector.load %arg8[%c0_106, %c0_107] : memref<8x128xf32, #tpu.memory_space<vmem>>, vector<8x128xf32>
      tpu.vector_store %arg8[%c0_106, %c0_107], %286 {strides = array<i32>} : memref<8x128xf32, #tpu.memory_space<vmem>>, vector<8x128xf32>,
      %cst_108 = arith.constant 0.000000e+00 : f32
      %288 = vector.broadcast %cst_108 : f32 to vector<8x128xf32>
      %c0_109 = arith.constant 0 : index
      %c0_110 = arith.constant 0 : index
      %289 = vector.load %arg9[%c0_109, %c0_110] : memref<8x128xf32, #tpu.memory_space<vmem>>, vector<8x128xf32>
      tpu.vector_store %arg9[%c0_109, %c0_110], %288 {strides = array<i32>} : memref<8x128xf32, #tpu.memory_space<vmem>>, vector<8x128xf32>,
      %cst_111 = arith.constant 0.000000e+00 : f32
      %290 = vector.broadcast %cst_111 : f32 to vector<8x128xf32>
      %c0_112 = arith.constant 0 : index
      %c0_113 = arith.constant 0 : index
      %291 = vector.load %arg10[%c0_112, %c0_113] : memref<8x128xf32, #tpu.memory_space<vmem>>, vector<8x128xf32>
      tpu.vector_store %arg10[%c0_112, %c0_113], %290 {strides = array<i32>} : memref<8x128xf32, #tpu.memory_space<vmem>>, vector<8x128xf32>,
    } else {
    }
    %c0 = arith.constant 0 : index
    %c0_1 = arith.constant 0 : index
    %3 = vector.load %arg3[%c0, %c0_1] : memref<8x1xi32, #tpu.memory_space<vmem>>, vector<8x1xi32>
    %c0_2 = arith.constant 0 : index
    %c0_3 = arith.constant 0 : index
    %4 = vector.load %arg4[%c0_2, %c0_3] : memref<1x512xf32, #tpu.memory_space<vmem>>, vector<1x512xf32>
    %c0_4 = arith.constant 0 : index
    %c0_5 = arith.constant 0 : index
    %5 = vector.load %arg5[%c0_4, %c0_5] : memref<128x512xf32, #tpu.memory_space<vmem>>, vector<128x512xf32>
    %c8_i32 = arith.constant 8 : i32
    %6 = arith.muli %arg1, %c8_i32 : i32
    %c0_6 = arith.constant 0 : index
    %c0_7 = arith.constant 0 : index
    %7 = vector.load %arg8[%c0_6, %c0_7] : memref<8x128xf32, #tpu.memory_space<vmem>>, vector<8x128xf32>
    %c0_8 = arith.constant 0 : index
    %c0_9 = arith.constant 0 : index
    %8 = vector.load %arg9[%c0_8, %c0_9] : memref<8x128xf32, #tpu.memory_space<vmem>>, vector<8x128xf32>
    %c0_i32_10 = arith.constant 0 : i32
    %9 = arith.index_cast %c0_i32_10 : i32 to index
    %c0_11 = arith.constant 0 : index
    %c0_12 = arith.constant 0 : index
    %10 = vector.load %arg2[%9, %c0_11, %c0_12] : memref<8x8x512xf32, #tpu.memory_space<vmem>>, vector<1x8x512xf32>
    %11 = vector.shape_cast %10 : vector<1x8x512xf32> to vector<8x512xf32>
    %12 = vector.broadcast %4 : vector<1x512xf32> to vector<8x512xf32>
    %13 = arith.addf %11, %12 : vector<8x512xf32>
    %cst = arith.constant dense<0.000000e+00> : vector<8x512xf32>
    %14 = tpu.matmul %7, %5, %cst {dimension_numbers = #tpu.dot_dimension_numbers<[1], [0], [0], [1], [0, 0, 1, 1], [], []>} : vector<8x128xf32>, vector<128x512xf32>, vector<8x512xf32> -> vector<8x512xf32>
    %15 = arith.addf %13, %14 : vector<8x512xf32>
    %16 = vector.extract_strided_slice %15 {offsets = [0, 0], sizes = [8, 384], strides = [1, 1]} : vector<8x512xf32> to vector<8x384xf32>
    %cst_13 = arith.constant 5.000000e-01 : f32
    %17 = vector.broadcast %cst_13 : f32 to vector<8x384xf32>
    %18 = arith.mulf %17, %16 : vector<8x384xf32>
    %19 = math.tanh %18 : vector<8x384xf32>
    %cst_14 = arith.constant 5.000000e-01 : f32
    %20 = vector.broadcast %cst_14 : f32 to vector<8x384xf32>
    %21 = arith.mulf %20, %19 : vector<8x384xf32>
    %cst_15 = arith.constant 5.000000e-01 : f32
    %22 = vector.broadcast %cst_15 : f32 to vector<8x384xf32>
    %23 = arith.addf %21, %22 : vector<8x384xf32>
    %24 = vector.extract_strided_slice %15 {offsets = [0, 384], sizes = [8, 128], strides = [1, 1]} : vector<8x512xf32> to vector<8x128xf32>
    %25 = math.tanh %24 : vector<8x128xf32>
    %26 = vector.extract_strided_slice %23 {offsets = [0, 0], sizes = [8, 128], strides = [1, 1]} : vector<8x384xf32> to vector<8x128xf32>
    %27 = vector.extract_strided_slice %23 {offsets = [0, 128], sizes = [8, 128], strides = [1, 1]} : vector<8x384xf32> to vector<8x128xf32>
    %28 = vector.extract_strided_slice %23 {offsets = [0, 256], sizes = [8, 128], strides = [1, 1]} : vector<8x384xf32> to vector<8x128xf32>
    %29 = arith.mulf %27, %8 : vector<8x128xf32>
    %30 = arith.mulf %26, %25 : vector<8x128xf32>
    %31 = arith.addf %29, %30 : vector<8x128xf32>
    %32 = math.tanh %31 : vector<8x128xf32>
    %33 = arith.mulf %28, %32 : vector<8x128xf32>
    %34 = arith.addi %6, %c0_i32_10 : i32
    %c1_i32 = arith.constant 1 : i32
    %35 = arith.addi %34, %c1_i32 : i32
    %36 = vector.broadcast %35 : i32 to vector<8x1xi32>
    %37 = arith.cmpi eq, %3, %36 : vector<8x1xi32>
    %c0_16 = arith.constant 0 : index
    %c0_17 = arith.constant 0 : index
    %38 = vector.load %arg10[%c0_16, %c0_17] : memref<8x128xf32, #tpu.memory_space<vmem>>, vector<8x128xf32>
    %39 = vector.shape_cast %37 : vector<8x1xi1> to vector<8x1xi1>
    %40 = vector.broadcast %39 : vector<8x1xi1> to vector<8x128xi1>
    %41 = arith.select %40, %33, %38 : vector<8x128xi1>, vector<8x128xf32>
    %c0_18 = arith.constant 0 : index
    %c0_19 = arith.constant 0 : index
    %42 = vector.load %arg10[%c0_18, %c0_19] : memref<8x128xf32, #tpu.memory_space<vmem>>, vector<8x128xf32>
    tpu.vector_store %arg10[%c0_18, %c0_19], %41 {strides = array<i32>} : memref<8x128xf32, #tpu.memory_space<vmem>>, vector<8x128xf32>,
    %c1_i32_20 = arith.constant 1 : i32
    %43 = arith.index_cast %c1_i32_20 : i32 to index
    %c0_21 = arith.constant 0 : index
    %c0_22 = arith.constant 0 : index
    %44 = vector.load %arg2[%43, %c0_21, %c0_22] : memref<8x8x512xf32, #tpu.memory_space<vmem>>, vector<1x8x512xf32>
    %45 = vector.shape_cast %44 : vector<1x8x512xf32> to vector<8x512xf32>
    %46 = vector.broadcast %4 : vector<1x512xf32> to vector<8x512xf32>
    %47 = arith.addf %45, %46 : vector<8x512xf32>
    %cst_23 = arith.constant dense<0.000000e+00> : vector<8x512xf32>
    %48 = tpu.matmul %33, %5, %cst_23 {dimension_numbers = #tpu.dot_dimension_numbers<[1], [0], [0], [1], [0, 0, 1, 1], [], []>} : vector<8x128xf32>, vector<128x512xf32>, vector<8x512xf32> -> vector<8x512xf32>
    %49 = arith.addf %47, %48 : vector<8x512xf32>
    %50 = vector.extract_strided_slice %49 {offsets = [0, 0], sizes = [8, 384], strides = [1, 1]} : vector<8x512xf32> to vector<8x384xf32>
    %cst_24 = arith.constant 5.000000e-01 : f32
    %51 = vector.broadcast %cst_24 : f32 to vector<8x384xf32>
    %52 = arith.mulf %51, %50 : vector<8x384xf32>
    %53 = math.tanh %52 : vector<8x384xf32>
    %cst_25 = arith.constant 5.000000e-01 : f32
    %54 = vector.broadcast %cst_25 : f32 to vector<8x384xf32>
    %55 = arith.mulf %54, %53 : vector<8x384xf32>
    %cst_26 = arith.constant 5.000000e-01 : f32
    %56 = vector.broadcast %cst_26 : f32 to vector<8x384xf32>
    %57 = arith.addf %55, %56 : vector<8x384xf32>
    %58 = vector.extract_strided_slice %49 {offsets = [0, 384], sizes = [8, 128], strides = [1, 1]} : vector<8x512xf32> to vector<8x128xf32>
    %59 = math.tanh %58 : vector<8x128xf32>
    %60 = vector.extract_strided_slice %57 {offsets = [0, 0], sizes = [8, 128], strides = [1, 1]} : vector<8x384xf32> to vector<8x128xf32>
    %61 = vector.extract_strided_slice %57 {offsets = [0, 128], sizes = [8, 128], strides = [1, 1]} : vector<8x384xf32> to vector<8x128xf32>
    %62 = vector.extract_strided_slice %57 {offsets = [0, 256], sizes = [8, 128], strides = [1, 1]} : vector<8x384xf32> to vector<8x128xf32>
    %63 = arith.mulf %61, %31 : vector<8x128xf32>
    %64 = arith.mulf %60, %59 : vector<8x128xf32>
    %65 = arith.addf %63, %64 : vector<8x128xf32>
    %66 = math.tanh %65 : vector<8x128xf32>
    %67 = arith.mulf %62, %66 : vector<8x128xf32>
    %68 = arith.addi %6, %c1_i32_20 : i32
    %c1_i32_27 = arith.constant 1 : i32
    %69 = arith.addi %68, %c1_i32_27 : i32
    %70 = vector.broadcast %69 : i32 to vector<8x1xi32>
    %71 = arith.cmpi eq, %3, %70 : vector<8x1xi32>
    %c0_28 = arith.constant 0 : index
    %c0_29 = arith.constant 0 : index
    %72 = vector.load %arg10[%c0_28, %c0_29] : memref<8x128xf32, #tpu.memory_space<vmem>>, vector<8x128xf32>
    %73 = vector.shape_cast %71 : vector<8x1xi1> to vector<8x1xi1>
    %74 = vector.broadcast %73 : vector<8x1xi1> to vector<8x128xi1>
    %75 = arith.select %74, %67, %72 : vector<8x128xi1>, vector<8x128xf32>
    %c0_30 = arith.constant 0 : index
    %c0_31 = arith.constant 0 : index
    %76 = vector.load %arg10[%c0_30, %c0_31] : memref<8x128xf32, #tpu.memory_space<vmem>>, vector<8x128xf32>
    tpu.vector_store %arg10[%c0_30, %c0_31], %75 {strides = array<i32>} : memref<8x128xf32, #tpu.memory_space<vmem>>, vector<8x128xf32>,
    %c2_i32 = arith.constant 2 : i32
    %77 = arith.index_cast %c2_i32 : i32 to index
    %c0_32 = arith.constant 0 : index
    %c0_33 = arith.constant 0 : index
    %78 = vector.load %arg2[%77, %c0_32, %c0_33] : memref<8x8x512xf32, #tpu.memory_space<vmem>>, vector<1x8x512xf32>
    %79 = vector.shape_cast %78 : vector<1x8x512xf32> to vector<8x512xf32>
    %80 = vector.broadcast %4 : vector<1x512xf32> to vector<8x512xf32>
    %81 = arith.addf %79, %80 : vector<8x512xf32>
    %cst_34 = arith.constant dense<0.000000e+00> : vector<8x512xf32>
    %82 = tpu.matmul %67, %5, %cst_34 {dimension_numbers = #tpu.dot_dimension_numbers<[1], [0], [0], [1], [0, 0, 1, 1], [], []>} : vector<8x128xf32>, vector<128x512xf32>, vector<8x512xf32> -> vector<8x512xf32>
    %83 = arith.addf %81, %82 : vector<8x512xf32>
    %84 = vector.extract_strided_slice %83 {offsets = [0, 0], sizes = [8, 384], strides = [1, 1]} : vector<8x512xf32> to vector<8x384xf32>
    %cst_35 = arith.constant 5.000000e-01 : f32
    %85 = vector.broadcast %cst_35 : f32 to vector<8x384xf32>
    %86 = arith.mulf %85, %84 : vector<8x384xf32>
    %87 = math.tanh %86 : vector<8x384xf32>
    %cst_36 = arith.constant 5.000000e-01 : f32
    %88 = vector.broadcast %cst_36 : f32 to vector<8x384xf32>
    %89 = arith.mulf %88, %87 : vector<8x384xf32>
    %cst_37 = arith.constant 5.000000e-01 : f32
    %90 = vector.broadcast %cst_37 : f32 to vector<8x384xf32>
    %91 = arith.addf %89, %90 : vector<8x384xf32>
    %92 = vector.extract_strided_slice %83 {offsets = [0, 384], sizes = [8, 128], strides = [1, 1]} : vector<8x512xf32> to vector<8x128xf32>
    %93 = math.tanh %92 : vector<8x128xf32>
    %94 = vector.extract_strided_slice %91 {offsets = [0, 0], sizes = [8, 128], strides = [1, 1]} : vector<8x384xf32> to vector<8x128xf32>
    %95 = vector.extract_strided_slice %91 {offsets = [0, 128], sizes = [8, 128], strides = [1, 1]} : vector<8x384xf32> to vector<8x128xf32>
    %96 = vector.extract_strided_slice %91 {offsets = [0, 256], sizes = [8, 128], strides = [1, 1]} : vector<8x384xf32> to vector<8x128xf32>
    %97 = arith.mulf %95, %65 : vector<8x128xf32>
    %98 = arith.mulf %94, %93 : vector<8x128xf32>
    %99 = arith.addf %97, %98 : vector<8x128xf32>
    %100 = math.tanh %99 : vector<8x128xf32>
    %101 = arith.mulf %96, %100 : vector<8x128xf32>
    %102 = arith.addi %6, %c2_i32 : i32
    %c1_i32_38 = arith.constant 1 : i32
    %103 = arith.addi %102, %c1_i32_38 : i32
    %104 = vector.broadcast %103 : i32 to vector<8x1xi32>
    %105 = arith.cmpi eq, %3, %104 : vector<8x1xi32>
    %c0_39 = arith.constant 0 : index
    %c0_40 = arith.constant 0 : index
    %106 = vector.load %arg10[%c0_39, %c0_40] : memref<8x128xf32, #tpu.memory_space<vmem>>, vector<8x128xf32>
    %107 = vector.shape_cast %105 : vector<8x1xi1> to vector<8x1xi1>
    %108 = vector.broadcast %107 : vector<8x1xi1> to vector<8x128xi1>
    %109 = arith.select %108, %101, %106 : vector<8x128xi1>, vector<8x128xf32>
    %c0_41 = arith.constant 0 : index
    %c0_42 = arith.constant 0 : index
    %110 = vector.load %arg10[%c0_41, %c0_42] : memref<8x128xf32, #tpu.memory_space<vmem>>, vector<8x128xf32>
    tpu.vector_store %arg10[%c0_41, %c0_42], %109 {strides = array<i32>} : memref<8x128xf32, #tpu.memory_space<vmem>>, vector<8x128xf32>,
    %c3_i32 = arith.constant 3 : i32
    %111 = arith.index_cast %c3_i32 : i32 to index
    %c0_43 = arith.constant 0 : index
    %c0_44 = arith.constant 0 : index
    %112 = vector.load %arg2[%111, %c0_43, %c0_44] : memref<8x8x512xf32, #tpu.memory_space<vmem>>, vector<1x8x512xf32>
    %113 = vector.shape_cast %112 : vector<1x8x512xf32> to vector<8x512xf32>
    %114 = vector.broadcast %4 : vector<1x512xf32> to vector<8x512xf32>
    %115 = arith.addf %113, %114 : vector<8x512xf32>
    %cst_45 = arith.constant dense<0.000000e+00> : vector<8x512xf32>
    %116 = tpu.matmul %101, %5, %cst_45 {dimension_numbers = #tpu.dot_dimension_numbers<[1], [0], [0], [1], [0, 0, 1, 1], [], []>} : vector<8x128xf32>, vector<128x512xf32>, vector<8x512xf32> -> vector<8x512xf32>
    %117 = arith.addf %115, %116 : vector<8x512xf32>
    %118 = vector.extract_strided_slice %117 {offsets = [0, 0], sizes = [8, 384], strides = [1, 1]} : vector<8x512xf32> to vector<8x384xf32>
    %cst_46 = arith.constant 5.000000e-01 : f32
    %119 = vector.broadcast %cst_46 : f32 to vector<8x384xf32>
    %120 = arith.mulf %119, %118 : vector<8x384xf32>
    %121 = math.tanh %120 : vector<8x384xf32>
    %cst_47 = arith.constant 5.000000e-01 : f32
    %122 = vector.broadcast %cst_47 : f32 to vector<8x384xf32>
    %123 = arith.mulf %122, %121 : vector<8x384xf32>
    %cst_48 = arith.constant 5.000000e-01 : f32
    %124 = vector.broadcast %cst_48 : f32 to vector<8x384xf32>
    %125 = arith.addf %123, %124 : vector<8x384xf32>
    %126 = vector.extract_strided_slice %117 {offsets = [0, 384], sizes = [8, 128], strides = [1, 1]} : vector<8x512xf32> to vector<8x128xf32>
    %127 = math.tanh %126 : vector<8x128xf32>
    %128 = vector.extract_strided_slice %125 {offsets = [0, 0], sizes = [8, 128], strides = [1, 1]} : vector<8x384xf32> to vector<8x128xf32>
    %129 = vector.extract_strided_slice %125 {offsets = [0, 128], sizes = [8, 128], strides = [1, 1]} : vector<8x384xf32> to vector<8x128xf32>
    %130 = vector.extract_strided_slice %125 {offsets = [0, 256], sizes = [8, 128], strides = [1, 1]} : vector<8x384xf32> to vector<8x128xf32>
    %131 = arith.mulf %129, %99 : vector<8x128xf32>
    %132 = arith.mulf %128, %127 : vector<8x128xf32>
    %133 = arith.addf %131, %132 : vector<8x128xf32>
    %134 = math.tanh %133 : vector<8x128xf32>
    %135 = arith.mulf %130, %134 : vector<8x128xf32>
    %136 = arith.addi %6, %c3_i32 : i32
    %c1_i32_49 = arith.constant 1 : i32
    %137 = arith.addi %136, %c1_i32_49 : i32
    %138 = vector.broadcast %137 : i32 to vector<8x1xi32>
    %139 = arith.cmpi eq, %3, %138 : vector<8x1xi32>
    %c0_50 = arith.constant 0 : index
    %c0_51 = arith.constant 0 : index
    %140 = vector.load %arg10[%c0_50, %c0_51] : memref<8x128xf32, #tpu.memory_space<vmem>>, vector<8x128xf32>
    %141 = vector.shape_cast %139 : vector<8x1xi1> to vector<8x1xi1>
    %142 = vector.broadcast %141 : vector<8x1xi1> to vector<8x128xi1>
    %143 = arith.select %142, %135, %140 : vector<8x128xi1>, vector<8x128xf32>
    %c0_52 = arith.constant 0 : index
    %c0_53 = arith.constant 0 : index
    %144 = vector.load %arg10[%c0_52, %c0_53] : memref<8x128xf32, #tpu.memory_space<vmem>>, vector<8x128xf32>
    tpu.vector_store %arg10[%c0_52, %c0_53], %143 {strides = array<i32>} : memref<8x128xf32, #tpu.memory_space<vmem>>, vector<8x128xf32>,
    %c4_i32 = arith.constant 4 : i32
    %145 = arith.index_cast %c4_i32 : i32 to index
    %c0_54 = arith.constant 0 : index
    %c0_55 = arith.constant 0 : index
    %146 = vector.load %arg2[%145, %c0_54, %c0_55] : memref<8x8x512xf32, #tpu.memory_space<vmem>>, vector<1x8x512xf32>
    %147 = vector.shape_cast %146 : vector<1x8x512xf32> to vector<8x512xf32>
    %148 = vector.broadcast %4 : vector<1x512xf32> to vector<8x512xf32>
    %149 = arith.addf %147, %148 : vector<8x512xf32>
    %cst_56 = arith.constant dense<0.000000e+00> : vector<8x512xf32>
    %150 = tpu.matmul %135, %5, %cst_56 {dimension_numbers = #tpu.dot_dimension_numbers<[1], [0], [0], [1], [0, 0, 1, 1], [], []>} : vector<8x128xf32>, vector<128x512xf32>, vector<8x512xf32> -> vector<8x512xf32>
    %151 = arith.addf %149, %150 : vector<8x512xf32>
    %152 = vector.extract_strided_slice %151 {offsets = [0, 0], sizes = [8, 384], strides = [1, 1]} : vector<8x512xf32> to vector<8x384xf32>
    %cst_57 = arith.constant 5.000000e-01 : f32
    %153 = vector.broadcast %cst_57 : f32 to vector<8x384xf32>
    %154 = arith.mulf %153, %152 : vector<8x384xf32>
    %155 = math.tanh %154 : vector<8x384xf32>
    %cst_58 = arith.constant 5.000000e-01 : f32
    %156 = vector.broadcast %cst_58 : f32 to vector<8x384xf32>
    %157 = arith.mulf %156, %155 : vector<8x384xf32>
    %cst_59 = arith.constant 5.000000e-01 : f32
    %158 = vector.broadcast %cst_59 : f32 to vector<8x384xf32>
    %159 = arith.addf %157, %158 : vector<8x384xf32>
    %160 = vector.extract_strided_slice %151 {offsets = [0, 384], sizes = [8, 128], strides = [1, 1]} : vector<8x512xf32> to vector<8x128xf32>
    %161 = math.tanh %160 : vector<8x128xf32>
    %162 = vector.extract_strided_slice %159 {offsets = [0, 0], sizes = [8, 128], strides = [1, 1]} : vector<8x384xf32> to vector<8x128xf32>
    %163 = vector.extract_strided_slice %159 {offsets = [0, 128], sizes = [8, 128], strides = [1, 1]} : vector<8x384xf32> to vector<8x128xf32>
    %164 = vector.extract_strided_slice %159 {offsets = [0, 256], sizes = [8, 128], strides = [1, 1]} : vector<8x384xf32> to vector<8x128xf32>
    %165 = arith.mulf %163, %133 : vector<8x128xf32>
    %166 = arith.mulf %162, %161 : vector<8x128xf32>
    %167 = arith.addf %165, %166 : vector<8x128xf32>
    %168 = math.tanh %167 : vector<8x128xf32>
    %169 = arith.mulf %164, %168 : vector<8x128xf32>
    %170 = arith.addi %6, %c4_i32 : i32
    %c1_i32_60 = arith.constant 1 : i32
    %171 = arith.addi %170, %c1_i32_60 : i32
    %172 = vector.broadcast %171 : i32 to vector<8x1xi32>
    %173 = arith.cmpi eq, %3, %172 : vector<8x1xi32>
    %c0_61 = arith.constant 0 : index
    %c0_62 = arith.constant 0 : index
    %174 = vector.load %arg10[%c0_61, %c0_62] : memref<8x128xf32, #tpu.memory_space<vmem>>, vector<8x128xf32>
    %175 = vector.shape_cast %173 : vector<8x1xi1> to vector<8x1xi1>
    %176 = vector.broadcast %175 : vector<8x1xi1> to vector<8x128xi1>
    %177 = arith.select %176, %169, %174 : vector<8x128xi1>, vector<8x128xf32>
    %c0_63 = arith.constant 0 : index
    %c0_64 = arith.constant 0 : index
    %178 = vector.load %arg10[%c0_63, %c0_64] : memref<8x128xf32, #tpu.memory_space<vmem>>, vector<8x128xf32>
    tpu.vector_store %arg10[%c0_63, %c0_64], %177 {strides = array<i32>} : memref<8x128xf32, #tpu.memory_space<vmem>>, vector<8x128xf32>,
    %c5_i32 = arith.constant 5 : i32
    %179 = arith.index_cast %c5_i32 : i32 to index
    %c0_65 = arith.constant 0 : index
    %c0_66 = arith.constant 0 : index
    %180 = vector.load %arg2[%179, %c0_65, %c0_66] : memref<8x8x512xf32, #tpu.memory_space<vmem>>, vector<1x8x512xf32>
    %181 = vector.shape_cast %180 : vector<1x8x512xf32> to vector<8x512xf32>
    %182 = vector.broadcast %4 : vector<1x512xf32> to vector<8x512xf32>
    %183 = arith.addf %181, %182 : vector<8x512xf32>
    %cst_67 = arith.constant dense<0.000000e+00> : vector<8x512xf32>
    %184 = tpu.matmul %169, %5, %cst_67 {dimension_numbers = #tpu.dot_dimension_numbers<[1], [0], [0], [1], [0, 0, 1, 1], [], []>} : vector<8x128xf32>, vector<128x512xf32>, vector<8x512xf32> -> vector<8x512xf32>
    %185 = arith.addf %183, %184 : vector<8x512xf32>
    %186 = vector.extract_strided_slice %185 {offsets = [0, 0], sizes = [8, 384], strides = [1, 1]} : vector<8x512xf32> to vector<8x384xf32>
    %cst_68 = arith.constant 5.000000e-01 : f32
    %187 = vector.broadcast %cst_68 : f32 to vector<8x384xf32>
    %188 = arith.mulf %187, %186 : vector<8x384xf32>
    %189 = math.tanh %188 : vector<8x384xf32>
    %cst_69 = arith.constant 5.000000e-01 : f32
    %190 = vector.broadcast %cst_69 : f32 to vector<8x384xf32>
    %191 = arith.mulf %190, %189 : vector<8x384xf32>
    %cst_70 = arith.constant 5.000000e-01 : f32
    %192 = vector.broadcast %cst_70 : f32 to vector<8x384xf32>
    %193 = arith.addf %191, %192 : vector<8x384xf32>
    %194 = vector.extract_strided_slice %185 {offsets = [0, 384], sizes = [8, 128], strides = [1, 1]} : vector<8x512xf32> to vector<8x128xf32>
    %195 = math.tanh %194 : vector<8x128xf32>
    %196 = vector.extract_strided_slice %193 {offsets = [0, 0], sizes = [8, 128], strides = [1, 1]} : vector<8x384xf32> to vector<8x128xf32>
    %197 = vector.extract_strided_slice %193 {offsets = [0, 128], sizes = [8, 128], strides = [1, 1]} : vector<8x384xf32> to vector<8x128xf32>
    %198 = vector.extract_strided_slice %193 {offsets = [0, 256], sizes = [8, 128], strides = [1, 1]} : vector<8x384xf32> to vector<8x128xf32>
    %199 = arith.mulf %197, %167 : vector<8x128xf32>
    %200 = arith.mulf %196, %195 : vector<8x128xf32>
    %201 = arith.addf %199, %200 : vector<8x128xf32>
    %202 = math.tanh %201 : vector<8x128xf32>
    %203 = arith.mulf %198, %202 : vector<8x128xf32>
    %204 = arith.addi %6, %c5_i32 : i32
    %c1_i32_71 = arith.constant 1 : i32
    %205 = arith.addi %204, %c1_i32_71 : i32
    %206 = vector.broadcast %205 : i32 to vector<8x1xi32>
    %207 = arith.cmpi eq, %3, %206 : vector<8x1xi32>
    %c0_72 = arith.constant 0 : index
    %c0_73 = arith.constant 0 : index
    %208 = vector.load %arg10[%c0_72, %c0_73] : memref<8x128xf32, #tpu.memory_space<vmem>>, vector<8x128xf32>
    %209 = vector.shape_cast %207 : vector<8x1xi1> to vector<8x1xi1>
    %210 = vector.broadcast %209 : vector<8x1xi1> to vector<8x128xi1>
    %211 = arith.select %210, %203, %208 : vector<8x128xi1>, vector<8x128xf32>
    %c0_74 = arith.constant 0 : index
    %c0_75 = arith.constant 0 : index
    %212 = vector.load %arg10[%c0_74, %c0_75] : memref<8x128xf32, #tpu.memory_space<vmem>>, vector<8x128xf32>
    tpu.vector_store %arg10[%c0_74, %c0_75], %211 {strides = array<i32>} : memref<8x128xf32, #tpu.memory_space<vmem>>, vector<8x128xf32>,
    %c6_i32 = arith.constant 6 : i32
    %213 = arith.index_cast %c6_i32 : i32 to index
    %c0_76 = arith.constant 0 : index
    %c0_77 = arith.constant 0 : index
    %214 = vector.load %arg2[%213, %c0_76, %c0_77] : memref<8x8x512xf32, #tpu.memory_space<vmem>>, vector<1x8x512xf32>
    %215 = vector.shape_cast %214 : vector<1x8x512xf32> to vector<8x512xf32>
    %216 = vector.broadcast %4 : vector<1x512xf32> to vector<8x512xf32>
    %217 = arith.addf %215, %216 : vector<8x512xf32>
    %cst_78 = arith.constant dense<0.000000e+00> : vector<8x512xf32>
    %218 = tpu.matmul %203, %5, %cst_78 {dimension_numbers = #tpu.dot_dimension_numbers<[1], [0], [0], [1], [0, 0, 1, 1], [], []>} : vector<8x128xf32>, vector<128x512xf32>, vector<8x512xf32> -> vector<8x512xf32>
    %219 = arith.addf %217, %218 : vector<8x512xf32>
    %220 = vector.extract_strided_slice %219 {offsets = [0, 0], sizes = [8, 384], strides = [1, 1]} : vector<8x512xf32> to vector<8x384xf32>
    %cst_79 = arith.constant 5.000000e-01 : f32
    %221 = vector.broadcast %cst_79 : f32 to vector<8x384xf32>
    %222 = arith.mulf %221, %220 : vector<8x384xf32>
    %223 = math.tanh %222 : vector<8x384xf32>
    %cst_80 = arith.constant 5.000000e-01 : f32
    %224 = vector.broadcast %cst_80 : f32 to vector<8x384xf32>
    %225 = arith.mulf %224, %223 : vector<8x384xf32>
    %cst_81 = arith.constant 5.000000e-01 : f32
    %226 = vector.broadcast %cst_81 : f32 to vector<8x384xf32>
    %227 = arith.addf %225, %226 : vector<8x384xf32>
    %228 = vector.extract_strided_slice %219 {offsets = [0, 384], sizes = [8, 128], strides = [1, 1]} : vector<8x512xf32> to vector<8x128xf32>
    %229 = math.tanh %228 : vector<8x128xf32>
    %230 = vector.extract_strided_slice %227 {offsets = [0, 0], sizes = [8, 128], strides = [1, 1]} : vector<8x384xf32> to vector<8x128xf32>
    %231 = vector.extract_strided_slice %227 {offsets = [0, 128], sizes = [8, 128], strides = [1, 1]} : vector<8x384xf32> to vector<8x128xf32>
    %232 = vector.extract_strided_slice %227 {offsets = [0, 256], sizes = [8, 128], strides = [1, 1]} : vector<8x384xf32> to vector<8x128xf32>
    %233 = arith.mulf %231, %201 : vector<8x128xf32>
    %234 = arith.mulf %230, %229 : vector<8x128xf32>
    %235 = arith.addf %233, %234 : vector<8x128xf32>
    %236 = math.tanh %235 : vector<8x128xf32>
    %237 = arith.mulf %232, %236 : vector<8x128xf32>
    %238 = arith.addi %6, %c6_i32 : i32
    %c1_i32_82 = arith.constant 1 : i32
    %239 = arith.addi %238, %c1_i32_82 : i32
    %240 = vector.broadcast %239 : i32 to vector<8x1xi32>
    %241 = arith.cmpi eq, %3, %240 : vector<8x1xi32>
    %c0_83 = arith.constant 0 : index
    %c0_84 = arith.constant 0 : index
    %242 = vector.load %arg10[%c0_83, %c0_84] : memref<8x128xf32, #tpu.memory_space<vmem>>, vector<8x128xf32>
    %243 = vector.shape_cast %241 : vector<8x1xi1> to vector<8x1xi1>
    %244 = vector.broadcast %243 : vector<8x1xi1> to vector<8x128xi1>
    %245 = arith.select %244, %237, %242 : vector<8x128xi1>, vector<8x128xf32>
    %c0_85 = arith.constant 0 : index
    %c0_86 = arith.constant 0 : index
    %246 = vector.load %arg10[%c0_85, %c0_86] : memref<8x128xf32, #tpu.memory_space<vmem>>, vector<8x128xf32>
    tpu.vector_store %arg10[%c0_85, %c0_86], %245 {strides = array<i32>} : memref<8x128xf32, #tpu.memory_space<vmem>>, vector<8x128xf32>,
    %c7_i32 = arith.constant 7 : i32
    %247 = arith.index_cast %c7_i32 : i32 to index
    %c0_87 = arith.constant 0 : index
    %c0_88 = arith.constant 0 : index
    %248 = vector.load %arg2[%247, %c0_87, %c0_88] : memref<8x8x512xf32, #tpu.memory_space<vmem>>, vector<1x8x512xf32>
    %249 = vector.shape_cast %248 : vector<1x8x512xf32> to vector<8x512xf32>
    %250 = vector.broadcast %4 : vector<1x512xf32> to vector<8x512xf32>
    %251 = arith.addf %249, %250 : vector<8x512xf32>
    %cst_89 = arith.constant dense<0.000000e+00> : vector<8x512xf32>
    %252 = tpu.matmul %237, %5, %cst_89 {dimension_numbers = #tpu.dot_dimension_numbers<[1], [0], [0], [1], [0, 0, 1, 1], [], []>} : vector<8x128xf32>, vector<128x512xf32>, vector<8x512xf32> -> vector<8x512xf32>
    %253 = arith.addf %251, %252 : vector<8x512xf32>
    %254 = vector.extract_strided_slice %253 {offsets = [0, 0], sizes = [8, 384], strides = [1, 1]} : vector<8x512xf32> to vector<8x384xf32>
    %cst_90 = arith.constant 5.000000e-01 : f32
    %255 = vector.broadcast %cst_90 : f32 to vector<8x384xf32>
    %256 = arith.mulf %255, %254 : vector<8x384xf32>
    %257 = math.tanh %256 : vector<8x384xf32>
    %cst_91 = arith.constant 5.000000e-01 : f32
    %258 = vector.broadcast %cst_91 : f32 to vector<8x384xf32>
    %259 = arith.mulf %258, %257 : vector<8x384xf32>
    %cst_92 = arith.constant 5.000000e-01 : f32
    %260 = vector.broadcast %cst_92 : f32 to vector<8x384xf32>
    %261 = arith.addf %259, %260 : vector<8x384xf32>
    %262 = vector.extract_strided_slice %253 {offsets = [0, 384], sizes = [8, 128], strides = [1, 1]} : vector<8x512xf32> to vector<8x128xf32>
    %263 = math.tanh %262 : vector<8x128xf32>
    %264 = vector.extract_strided_slice %261 {offsets = [0, 0], sizes = [8, 128], strides = [1, 1]} : vector<8x384xf32> to vector<8x128xf32>
    %265 = vector.extract_strided_slice %261 {offsets = [0, 128], sizes = [8, 128], strides = [1, 1]} : vector<8x384xf32> to vector<8x128xf32>
    %266 = vector.extract_strided_slice %261 {offsets = [0, 256], sizes = [8, 128], strides = [1, 1]} : vector<8x384xf32> to vector<8x128xf32>
    %267 = arith.mulf %265, %235 : vector<8x128xf32>
    %268 = arith.mulf %264, %263 : vector<8x128xf32>
    %269 = arith.addf %267, %268 : vector<8x128xf32>
    %270 = math.tanh %269 : vector<8x128xf32>
    %271 = arith.mulf %266, %270 : vector<8x128xf32>
    %272 = arith.addi %6, %c7_i32 : i32
    %c1_i32_93 = arith.constant 1 : i32
    %273 = arith.addi %272, %c1_i32_93 : i32
    %274 = vector.broadcast %273 : i32 to vector<8x1xi32>
    %275 = arith.cmpi eq, %3, %274 : vector<8x1xi32>
    %c0_94 = arith.constant 0 : index
    %c0_95 = arith.constant 0 : index
    %276 = vector.load %arg10[%c0_94, %c0_95] : memref<8x128xf32, #tpu.memory_space<vmem>>, vector<8x128xf32>
    %277 = vector.shape_cast %275 : vector<8x1xi1> to vector<8x1xi1>
    %278 = vector.broadcast %277 : vector<8x1xi1> to vector<8x128xi1>
    %279 = arith.select %278, %271, %276 : vector<8x128xi1>, vector<8x128xf32>
    %c0_96 = arith.constant 0 : index
    %c0_97 = arith.constant 0 : index
    %280 = vector.load %arg10[%c0_96, %c0_97] : memref<8x128xf32, #tpu.memory_space<vmem>>, vector<8x128xf32>
    tpu.vector_store %arg10[%c0_96, %c0_97], %279 {strides = array<i32>} : memref<8x128xf32, #tpu.memory_space<vmem>>, vector<8x128xf32>,
    %c8_i32_98 = arith.constant 8 : i32
    %c0_99 = arith.constant 0 : index
    %c0_100 = arith.constant 0 : index
    %281 = vector.load %arg8[%c0_99, %c0_100] : memref<8x128xf32, #tpu.memory_space<vmem>>, vector<8x128xf32>
    tpu.vector_store %arg8[%c0_99, %c0_100], %271 {strides = array<i32>} : memref<8x128xf32, #tpu.memory_space<vmem>>, vector<8x128xf32>,
    %c0_101 = arith.constant 0 : index
    %c0_102 = arith.constant 0 : index
    %282 = vector.load %arg9[%c0_101, %c0_102] : memref<8x128xf32, #tpu.memory_space<vmem>>, vector<8x128xf32>
    tpu.vector_store %arg9[%c0_101, %c0_102], %269 {strides = array<i32>} : memref<8x128xf32, #tpu.memory_space<vmem>>, vector<8x128xf32>,
    %c0_i32_103 = arith.constant 0 : i32
    %283 = arith.cmpi eq, %arg1, %c0_i32_103 : i32
    %284 = arith.extui %283 : i1 to i32
    %c0_i32_104 = arith.constant 0 : i32
    %285 = arith.cmpi ne, %284, %c0_i32_104 : i32
    scf.if %285 {
      %c0_105 = arith.constant 0 : index
      %c0_106 = arith.constant 0 : index
      %286 = vector.load %arg10[%c0_105, %c0_106] : memref<8x128xf32, #tpu.memory_space<vmem>>, vector<8x128xf32>
      %c0_107 = arith.constant 0 : index
      %c0_108 = arith.constant 0 : index
      %287 = vector.load %arg6[%c0_107, %c0_108] : memref<128x128xf32, #tpu.memory_space<vmem>>, vector<128x128xf32>
      %cst_109 = arith.constant dense<0.000000e+00> : vector<8x128xf32>
      %288 = tpu.matmul %286, %287, %cst_109 {dimension_numbers = #tpu.dot_dimension_numbers<[1], [0], [0], [1], [0, 0, 1, 1], [], []>} : vector<8x128xf32>, vector<128x128xf32>, vector<8x128xf32> -> vector<8x128xf32>
      %c0_110 = arith.constant 0 : index
      %c0_111 = arith.constant 0 : index
      %289 = vector.load %arg7[%c0_110, %c0_111] : memref<8x128xf32, #tpu.memory_space<vmem>>, vector<8x128xf32>
      tpu.vector_store %arg7[%c0_110, %c0_111], %288 {strides = array<i32>} : memref<8x128xf32, #tpu.memory_space<vmem>>, vector<8x128xf32>,
    } else {
    }
    return
  }
  func.func @transform_0(%arg0: i32, %arg1: i32) -> (i32, i32, i32) {
    %c0_i32 = arith.constant 0 : i32
    %c0_i32_0 = arith.constant 0 : i32
    return %arg1, %arg0, %c0_i32 : i32, i32, i32
  }
  func.func @transform_1(%arg0: i32, %arg1: i32) -> (i32, i32) {
    %c0_i32 = arith.constant 0 : i32
    %c0_i32_0 = arith.constant 0 : i32
    return %arg0, %c0_i32 : i32, i32
  }
  func.func @transform_2(%arg0: i32, %arg1: i32) -> (i32, i32) {
    %c0_i32 = arith.constant 0 : i32
    %c0_i32_0 = arith.constant 0 : i32
    %c0_i32_1 = arith.constant 0 : i32
    return %c0_i32, %c0_i32_0 : i32, i32
  }
  func.func @transform_3(%arg0: i32, %arg1: i32) -> (i32, i32) {
    %c0_i32 = arith.constant 0 : i32
    %c0_i32_0 = arith.constant 0 : i32
    %c0_i32_1 = arith.constant 0 : i32
    return %c0_i32, %c0_i32_0 : i32, i32
  }
  func.func @transform_4(%arg0: i32, %arg1: i32) -> (i32, i32) {
    %c0_i32 = arith.constant 0 : i32
    %c0_i32_0 = arith.constant 0 : i32
    %c0_i32_1 = arith.constant 0 : i32
    return %c0_i32, %c0_i32_0 : i32, i32
  }
  func.func @transform_5(%arg0: i32, %arg1: i32) -> (i32, i32) {
    %c0_i32 = arith.constant 0 : i32
    %c0_i32_0 = arith.constant 0 : i32
    return %arg0, %c0_i32 : i32, i32
  }
}

</mosaic_0001>

<llo_original>
// kernel: tpu_custom_call.1
$region0: #{tpu_custom_call.1}
  #allocation0 [shape = 'u32[]', space=smem, size = 0x4, offset = 0x4, fixed_abs, tag = 'smem constant byte address 0x4 - core index']
  #allocation1 [shape = 'u32[144,128]{1,0:T(1,128)}', space=vmem, size = 0x12000, scoped, tag = 'internal scratch']
  #allocation2 [shape = 'f32[8,128]{1,0:T(8,128)}', space=vmem, size = 0x1000, scoped, tag = 'scratch operand']
  #allocation3 [shape = 'f32[8,128]{1,0:T(8,128)}', space=vmem, size = 0x1000, scoped, tag = 'scratch operand']
  #allocation4 [shape = 'f32[8,128]{1,0:T(8,128)}', space=vmem, size = 0x1000, scoped, tag = 'scratch operand']
  %s0 = inlined_call_operand.hbm [shape: f32[8,8,512], index: 0, kind: input, shape index: {}]
  %s1 = inlined_call_operand.vmem [shape: s32[8,1], index: 1, kind: input, shape index: {}]
  %s2 = inlined_call_operand.vmem [shape: f32[1,512], index: 2, kind: input, shape index: {}]
  %s3 = inlined_call_operand.hbm [shape: f32[128,512], index: 3, kind: input, shape index: {}]
  %s4 = inlined_call_operand.hbm [shape: f32[128,128], index: 4, kind: input, shape index: {}]
  %s5 = inlined_call_operand.hbm [shape: f32[8,128], index: 5, kind: output, shape index: {}]
  %s6 = sld [smem:[#allocation0]]
  $region50: #{tpu_custom_call.1} parent=0
    _
  %s8 = ssub.s32 1, %s6
  %s9 = scalar_select 0, %s8, %s6
  $region1: #{tpu_custom_call.1} parent=0
    #allocation5 [shape = 'u8[131072]{0}', space=vmem, size = 0x20000, scoped, tag = 'input window, operand 0, single buffered']
    #allocation6 [shape = 's32[1]{0}', space=sflag, size = 0x4, scoped, tag = 'scoped memory for tpu_custom_call.1']
    #allocation7 [shape = 's32[1]{0}', space=sflag, size = 0x4, scoped, tag = 'scoped memory for tpu_custom_call.1']
    #allocation8 [shape = 'u8[262144]{0}', space=vmem, size = 0x40000, scoped, tag = 'input window, operand 3, single buffered']
    #allocation9 [shape = 's32[1]{0}', space=sflag, size = 0x4, scoped, tag = 'scoped memory for tpu_custom_call.1']
    #allocation10 [shape = 'u8[65536]{0}', space=vmem, size = 0x10000, scoped, tag = 'input window, operand 4, single buffered']
    #allocation11 [shape = 'u8[4096]{0}', space=vmem, size = 0x1000, scoped, tag = 'output window, operand 0, single buffered']
    %10 = vsyncpa [#allocation6], 0
    %11 = vsyncpa [#allocation9], 0
    %12 = vsyncpa [#allocation7], 0
    // Predicated region
    $region2: #{tpu_custom_call.1} parent=1 // pred_check
      _
    $region3: #{tpu_custom_call.1} parent=1 // pred_check_branch
      %14 = sbr.rel (0) target = $region5
    $region4: #{tpu_custom_call.1} parent=1 // pred_region
      %s16 = ssub.s32 4096, 4096
      %17 = vsyncadd [#allocation6], %s16
      %s18 = sshll.u32 [#allocation5], 4
      %s19 = int_to_ptr.vmem [resolvable:$true] %s18
      %24 = dma.hbm_to_vmem [thread:$0]  %s0, 4096, %s19, [#allocation6], 512, 512, 32
    $region5: #{tpu_custom_call.1} parent=1 // pred_fallthru
      _
    // Predicated region
    $region6: #{tpu_custom_call.1} parent=1 // pred_check
      _
    $region7: #{tpu_custom_call.1} parent=1 // pred_check_branch
      %26 = sbr.rel (0) target = $region9
    $region8: #{tpu_custom_call.1} parent=1 // pred_region
      _
    $region9: #{tpu_custom_call.1} parent=1 // pred_fallthru
      _
    // Predicated region
    $region10: #{tpu_custom_call.1} parent=1 // pred_check
      _
    $region11: #{tpu_custom_call.1} parent=1 // pred_check_branch
      %28 = sbr.rel (0) target = $region13
    $region12: #{tpu_custom_call.1} parent=1 // pred_region
      _
    $region13: #{tpu_custom_call.1} parent=1 // pred_fallthru
      _
    // Predicated region
    $region14: #{tpu_custom_call.1} parent=1 // pred_check
      _
    $region15: #{tpu_custom_call.1} parent=1 // pred_check_branch
      %30 = sbr.rel (0) target = $region17
    $region16: #{tpu_custom_call.1} parent=1 // pred_region
      %s32 = ssub.s32 8192, 8192
      %33 = vsyncadd [#allocation9], %s32
      %s34 = sshll.u32 [#allocation8], 4
      %s35 = int_to_ptr.vmem [resolvable:$true] %s34
      %40 = dma.hbm_to_vmem [thread:$0]  %s3, 8192, %s35, [#allocation9], 512, 512, 32
    $region17: #{tpu_custom_call.1} parent=1 // pred_fallthru
      _
    // Predicated region
    $region18: #{tpu_custom_call.1} parent=1 // pred_check
      _
    $region19: #{tpu_custom_call.1} parent=1 // pred_check_branch
      %42 = sbr.rel (0) target = $region21
    $region20: #{tpu_custom_call.1} parent=1 // pred_region
      %s44 = ssub.s32 2048, 2048
      %45 = vsyncadd [#allocation9], %s44
      %s46 = sshll.u32 [#allocation10], 4
      %s47 = int_to_ptr.vmem [resolvable:$true] %s46
      %52 = dma.hbm_to_vmem [thread:$0]  %s4, 2048, %s47, [#allocation9], 128, 128, 8
    $region21: #{tpu_custom_call.1} parent=1 // pred_fallthru
      _
    // Predicated region
    $region22: #{tpu_custom_call.1} parent=1 // pred_check
      _
    $region23: #{tpu_custom_call.1} parent=1 // pred_check_branch
      %54 = sbr.rel (0) target = $region25
    $region24: #{tpu_custom_call.1} parent=1 // pred_region
      %55 = dma.done [#allocation6], 4096
    $region25: #{tpu_custom_call.1} parent=1 // pred_fallthru
      _
    // Predicated region
    $region26: #{tpu_custom_call.1} parent=1 // pred_check
      _
    $region27: #{tpu_custom_call.1} parent=1 // pred_check_branch
      %57 = sbr.rel (0) target = $region29
    $region28: #{tpu_custom_call.1} parent=1 // pred_region
      %58 = dma.done [#allocation9], 8192
    $region29: #{tpu_custom_call.1} parent=1 // pred_fallthru
      _
    // Predicated region
    $region30: #{tpu_custom_call.1} parent=1 // pred_check
      _
    $region31: #{tpu_custom_call.1} parent=1 // pred_check_branch
      %60 = sbr.rel (0) target = $region33
    $region32: #{tpu_custom_call.1} parent=1 // pred_region
      %61 = dma.done [#allocation9], 2048
    $region33: #{tpu_custom_call.1} parent=1 // pred_fallthru
      _
    %p62 = scmp.eq.s32.totalorder 0, 0
    // Predicated region
    $region34: #{tpu_custom_call.1} parent=1 // pred_check
      %p63 = pneg %p62
    $region35: #{tpu_custom_call.1} parent=1 // pred_check_branch
      %65 = sbr.rel (%p63) target = $region37
    $region36: #{tpu_custom_call.1} parent=1 // pred_region
      %66 = vst [vmem:[#allocation2] sm:$0xff] 0.0
      %67 = vst [vmem:[#allocation3] sm:$0xff] 0.0
      %68 = vst [vmem:[#allocation4] sm:$0xff] 0.0
    $region37: #{tpu_custom_call.1} parent=1 // pred_fallthru
      _
    %v69 = vld [vmem:[%s1] sm:$0xff]
    %v70 = vld [vmem:[%s2] sm:$0xf]
    %v71 = vld [vmem:[#allocation8] sm:$0xff]
    %v72 = vld [vmem:[#allocation8 + $0x8] sm:$0xff]
    %v73 = vld [vmem:[#allocation8 + $0x10] sm:$0xff]
    %v74 = vld [vmem:[#allocation8 + $0x18] sm:$0xff]
    %v75 = vld [vmem:[#allocation8 + $0x20] sm:$0xff]
    %v76 = vld [vmem:[#allocation8 + $0x28] sm:$0xff]
    %v77 = vld [vmem:[#allocation8 + $0x30] sm:$0xff]
    %v78 = vld [vmem:[#allocation8 + $0x38] sm:$0xff]
    %v79 = vld [vmem:[#allocation8 + $0x40] sm:$0xff]
    %v80 = vld [vmem:[#allocation8 + $0x48] sm:$0xff]
    %v81 = vld [vmem:[#allocation8 + $0x50] sm:$0xff]
    %v82 = vld [vmem:[#allocation8 + $0x58] sm:$0xff]
    %v83 = vld [vmem:[#allocation8 + $0x60] sm:$0xff]
    %v84 = vld [vmem:[#allocation8 + $0x68] sm:$0xff]
    %v85 = vld [vmem:[#allocation8 + $0x70] sm:$0xff]
    %v86 = vld [vmem:[#allocation8 + $0x78] sm:$0xff]
    %v87 = vld [vmem:[#allocation8 + $0x80] sm:$0xff]
    %v88 = vld [vmem:[#allocation8 + $0x88] sm:$0xff]
    %v89 = vld [vmem:[#allocation8 + $0x90] sm:$0xff]
    %v90 = vld [vmem:[#allocation8 + $0x98] sm:$0xff]
    %v91 = vld [vmem:[#allocation8 + $0xa0] sm:$0xff]
    %v92 = vld [vmem:[#allocation8 + $0xa8] sm:$0xff]
    %v93 = vld [vmem:[#allocation8 + $0xb0] sm:$0xff]
    %v94 = vld [vmem:[#allocation8 + $0xb8] sm:$0xff]
    %v95 = vld [vmem:[#allocation8 + $0xc0] sm:$0xff]
    %v96 = vld [vmem:[#allocation8 + $0xc8] sm:$0xff]
    %v97 = vld [vmem:[#allocation8 + $0xd0] sm:$0xff]
    %v98 = vld [vmem:[#allocation8 + $0xd8] sm:$0xff]
    %v99 = vld [vmem:[#allocation8 + $0xe0] sm:$0xff]
    %v100 = vld [vmem:[#allocation8 + $0xe8] sm:$0xff]
    %v101 = vld [vmem:[#allocation8 + $0xf0] sm:$0xff]
    %v102 = vld [vmem:[#allocation8 + $0xf8] sm:$0xff]
    %v103 = vld [vmem:[#allocation8 + $0x100] sm:$0xff]
    %v104 = vld [vmem:[#allocation8 + $0x108] sm:$0xff]
    %v105 = vld [vmem:[#allocation8 + $0x110] sm:$0xff]
    %v106 = vld [vmem:[#allocation8 + $0x118] sm:$0xff]
    %v107 = vld [vmem:[#allocation8 + $0x120] sm:$0xff]
    %v108 = vld [vmem:[#allocation8 + $0x128] sm:$0xff]
    %v109 = vld [vmem:[#allocation8 + $0x130] sm:$0xff]
    %v110 = vld [vmem:[#allocation8 + $0x138] sm:$0xff]
    %v111 = vld [vmem:[#allocation8 + $0x140] sm:$0xff]
    %v112 = vld [vmem:[#allocation8 + $0x148] sm:$0xff]
    %v113 = vld [vmem:[#allocation8 + $0x150] sm:$0xff]
    %v114 = vld [vmem:[#allocation8 + $0x158] sm:$0xff]
    %v115 = vld [vmem:[#allocation8 + $0x160] sm:$0xff]
    %v116 = vld [vmem:[#allocation8 + $0x168] sm:$0xff]
    %v117 = vld [vmem:[#allocation8 + $0x170] sm:$0xff]
    %v118 = vld [vmem:[#allocation8 + $0x178] sm:$0xff]
    %v119 = vld [vmem:[#allocation8 + $0x180] sm:$0xff]
    %v120 = vld [vmem:[#allocation8 + $0x188] sm:$0xff]
    %v121 = vld [vmem:[#allocation8 + $0x190] sm:$0xff]
    %v122 = vld [vmem:[#allocation8 + $0x198] sm:$0xff]
    %v123 = vld [vmem:[#allocation8 + $0x1a0] sm:$0xff]
    %v124 = vld [vmem:[#allocation8 + $0x1a8] sm:$0xff]
    %v125 = vld [vmem:[#allocation8 + $0x1b0] sm:$0xff]
    %v126 = vld [vmem:[#allocation8 + $0x1b8] sm:$0xff]
    %v127 = vld [vmem:[#allocation8 + $0x1c0] sm:$0xff]
    %v128 = vld [vmem:[#allocation8 + $0x1c8] sm:$0xff]
    %v129 = vld [vmem:[#allocation8 + $0x1d0] sm:$0xff]
    %v130 = vld [vmem:[#allocation8 + $0x1d8] sm:$0xff]
    %v131 = vld [vmem:[#allocation8 + $0x1e0] sm:$0xff]
    %v132 = vld [vmem:[#allocation8 + $0x1e8] sm:$0xff]
    %v133 = vld [vmem:[#allocation8 + $0x1f0] sm:$0xff]
    %v134 = vld [vmem:[#allocation8 + $0x1f8] sm:$0xff]
    %s135 = smul.u32 0, 8
    %v136 = vld [vmem:[#allocation2] sm:$0xff]
    %v137 = vld [vmem:[#allocation3] sm:$0xff]
    %v138 = vld [vmem:[#allocation5] sm:$0xff]
    %v139 = vld [vmem:[#allocation5 + $0x8] sm:$0xff]
    %v140 = vld [vmem:[#allocation5 + $0x10] sm:$0xff]
    %v141 = vld [vmem:[#allocation5 + $0x18] sm:$0xff]
    %v143 = vlaneseq
    %v144 = vshrl.u32 %v143, 7
    %v145 = vsub.s32 0, %v144
    %v146 = vrot.slane %v70, %v145
    %v147 = vlaneseq
    %v148 = vshrl.u32 %v147, 7
    %v149 = vsub.s32 1, %v148
    %v150 = vrot.slane %v70, %v149
    %v151 = vlaneseq
    %v152 = vshrl.u32 %v151, 7
    %v153 = vsub.s32 2, %v152
    %v154 = vrot.slane %v70, %v153
    %v155 = vlaneseq
    %v156 = vshrl.u32 %v155, 7
    %v157 = vsub.s32 3, %v156
    %v158 = vrot.slane %v70, %v157
    %v163 = vadd.f32 %v138, %v146
    %v164 = vadd.f32 %v139, %v150
    %v165 = vadd.f32 %v140, %v154
    %v166 = vadd.f32 %v141, %v158
    %167 = vmatprep.subr.mxu0 %v72
    %168 = vmatpush1.msra.mxu0 %v71
    %169 = vmatprep.subr.mxu0 %v76
    %170 = vmatpush1.msra.mxu0 %v75
    %171 = vmatprep.subr.mxu0 %v80
    %172 = vmatpush1.msra.mxu0 %v79
    %173 = vmatprep.subr.mxu0 %v84
    %174 = vmatpush1.msra.mxu0 %v83
    %175 = vmatprep.subr.mxu0 %v88
    %176 = vmatpush1.msra.mxu0 %v87
    %177 = vmatprep.subr.mxu0 %v92
    %178 = vmatpush1.msra.mxu0 %v91
    %179 = vmatprep.subr.mxu0 %v96
    %180 = vmatpush1.msra.mxu0 %v95
    %181 = vmatprep.subr.mxu0 %v100
    %182 = vmatpush1.msra.mxu0 %v99
    %183 = vmatprep.subr.mxu0 %v104
    %184 = vmatpush1.msra.mxu0 %v103
    %185 = vmatprep.subr.mxu0 %v108
    %186 = vmatpush1.msra.mxu0 %v107
    %187 = vmatprep.subr.mxu0 %v112
    %188 = vmatpush1.msra.mxu0 %v111
    %189 = vmatprep.subr.mxu0 %v116
    %190 = vmatpush1.msra.mxu0 %v115
    %191 = vmatprep.subr.mxu0 %v120
    %192 = vmatpush1.msra.mxu0 %v119
    %193 = vmatprep.subr.mxu0 %v124
    %194 = vmatpush1.msra.mxu0 %v123
    %195 = vmatprep.subr.mxu0 %v128
    %196 = vmatpush1.msra.mxu0 %v127
    %197 = vmatprep.subr.mxu0 %v132
    %198 = vmatpush1.msra.mxu0 %v131
    %199 = vmatprep.subr.mxu0 0.0
    %200 = vmatpush1.msra.mxu0 0.0
    %201 = vmatprep.subr.mxu0 0.0
    %202 = vmatpush1.msra.mxu0 0.0
    %203 = vmatprep.subr.mxu0 0.0
    %204 = vmatpush1.msra.mxu0 0.0
    %205 = vmatprep.subr.mxu0 0.0
    %206 = vmatpush1.msra.mxu0 0.0
    %207 = vmatprep.subr.mxu0 0.0
    %208 = vmatpush1.msra.mxu0 0.0
    %209 = vmatprep.subr.mxu0 0.0
    %210 = vmatpush1.msra.mxu0 0.0
    %211 = vmatprep.subr.mxu0 0.0
    %212 = vmatpush1.msra.mxu0 0.0
    %213 = vmatprep.subr.mxu0 0.0
    %214 = vmatpush1.msra.mxu0 0.0
    %215 = vmatprep.subr.mxu0 0.0
    %216 = vmatpush1.msra.mxu0 0.0
    %217 = vmatprep.subr.mxu0 0.0
    %218 = vmatpush1.msra.mxu0 0.0
    %219 = vmatprep.subr.mxu0 0.0
    %220 = vmatpush1.msra.mxu0 0.0
    %221 = vmatprep.subr.mxu0 0.0
    %222 = vmatpush1.msra.mxu0 0.0
    %223 = vmatprep.subr.mxu0 0.0
    %224 = vmatpush1.msra.mxu0 0.0
    %225 = vmatprep.subr.mxu0 0.0
    %226 = vmatpush1.msra.mxu0 0.0
    %227 = vmatprep.subr.mxu0 0.0
    %228 = vmatpush1.msra.mxu0 0.0
    %229 = vmatprep.subr.mxu0 0.0
    %230 = vmatpush1.msra.mxu0 0.0
    %231 = vmatprep.mubr.f32.mxu0 0.0
    %232 = vmatmul.mubr.f32.gmra.mrb[0].mxu0 %v136
    %v233 = vpop.f32.mrb[0].mxu0
    %v234 = vadd.f32 0.0, %v233
    %v235 = vpop.f32.mrb[0].mxu0
    %v236 = vadd.f32 0.0, %v235
    %237 = vdwg.mxu0
    %238 = vmatprep.subr.mxu0 %v74
    %239 = vmatpush1.msra.mxu0 %v73
    %240 = vmatprep.subr.mxu0 %v78
    %241 = vmatpush1.msra.mxu0 %v77
    %242 = vmatprep.subr.mxu0 %v82
    %243 = vmatpush1.msra.mxu0 %v81
    %244 = vmatprep.subr.mxu0 %v86
    %245 = vmatpush1.msra.mxu0 %v85
    %246 = vmatprep.subr.mxu0 %v90
    %247 = vmatpush1.msra.mxu0 %v89
    %248 = vmatprep.subr.mxu0 %v94
    %249 = vmatpush1.msra.mxu0 %v93
    %250 = vmatprep.subr.mxu0 %v98
    %251 = vmatpush1.msra.mxu0 %v97
    %252 = vmatprep.subr.mxu0 %v102
    %253 = vmatpush1.msra.mxu0 %v101
    %254 = vmatprep.subr.mxu0 %v106
    %255 = vmatpush1.msra.mxu0 %v105
    %256 = vmatprep.subr.mxu0 %v110
    %257 = vmatpush1.msra.mxu0 %v109
    %258 = vmatprep.subr.mxu0 %v114
    %259 = vmatpush1.msra.mxu0 %v113
    %260 = vmatprep.subr.mxu0 %v118
    %261 = vmatpush1.msra.mxu0 %v117
    %262 = vmatprep.subr.mxu0 %v122
    %263 = vmatpush1.msra.mxu0 %v121
    %264 = vmatprep.subr.mxu0 %v126
    %265 = vmatpush1.msra.mxu0 %v125
    %266 = vmatprep.subr.mxu0 %v130
    %267 = vmatpush1.msra.mxu0 %v129
    %268 = vmatprep.subr.mxu0 %v134
    %269 = vmatpush1.msra.mxu0 %v133
    %270 = vmatprep.subr.mxu0 0.0
    %271 = vmatpush1.msra.mxu0 0.0
    %272 = vmatprep.subr.mxu0 0.0
    %273 = vmatpush1.msra.mxu0 0.0
    %274 = vmatprep.subr.mxu0 0.0
    %275 = vmatpush1.msra.mxu0 0.0
    %276 = vmatprep.subr.mxu0 0.0
    %277 = vmatpush1.msra.mxu0 0.0
    %278 = vmatprep.subr.mxu0 0.0
    %279 = vmatpush1.msra.mxu0 0.0
    %280 = vmatprep.subr.mxu0 0.0
    %281 = vmatpush1.msra.mxu0 0.0
    %282 = vmatprep.subr.mxu0 0.0
    %283 = vmatpush1.msra.mxu0 0.0
    %284 = vmatprep.subr.mxu0 0.0
    %285 = vmatpush1.msra.mxu0 0.0
    %286 = vmatprep.subr.mxu0 0.0
    %287 = vmatpush1.msra.mxu0 0.0
    %288 = vmatprep.subr.mxu0 0.0
    %289 = vmatpush1.msra.mxu0 0.0
    %290 = vmatprep.subr.mxu0 0.0
    %291 = vmatpush1.msra.mxu0 0.0
    %292 = vmatprep.subr.mxu0 0.0
    %293 = vmatpush1.msra.mxu0 0.0
    %294 = vmatprep.subr.mxu0 0.0
    %295 = vmatpush1.msra.mxu0 0.0
    %296 = vmatprep.subr.mxu0 0.0
    %297 = vmatpush1.msra.mxu0 0.0
    %298 = vmatprep.subr.mxu0 0.0
    %299 = vmatpush1.msra.mxu0 0.0
    %300 = vmatprep.subr.mxu0 0.0
    %301 = vmatpush1.msra.mxu0 0.0
    %302 = vmatprep.mubr.f32.mxu0 0.0
    %303 = vmatmul.mubr.f32.gmra.mrb[0].mxu0 %v136
    %v304 = vpop.f32.mrb[0].mxu0
    %v305 = vadd.f32 0.0, %v304
    %v306 = vpop.f32.mrb[0].mxu0
    %v307 = vadd.f32 0.0, %v306
    %308 = vdwg.mxu0
    %v309 = vadd.f32 %v163, %v234
    %v310 = vadd.f32 %v164, %v236
    %v311 = vadd.f32 %v165, %v305
    %v312 = vadd.f32 %v166, %v307
    %v313 = vmul.f32 %v309, 0.5
    %v314 = vmul.f32 %v310, 0.5
    %v315 = vmul.f32 %v311, 0.5
    %v316 = vtanh.pop %v313
    %v317 = vtanh.pop %v314
    %v318 = vtanh.pop %v315
    %v319 = vmul.f32 %v316, 0.5
    %v320 = vmul.f32 %v317, 0.5
    %v321 = vmul.f32 %v318, 0.5
    %v322 = vadd.f32 %v319, 0.5
    %v323 = vadd.f32 %v320, 0.5
    %v324 = vadd.f32 %v321, 0.5
    %v325 = vtanh.pop %v312
    %v326 = vmul.f32 %v323, %v137
    %v327 = vmul.f32 %v322, %v325
    %v328 = vadd.f32 %v326, %v327
    %v329 = vtanh.pop %v328
    %v330 = vmul.f32 %v324, %v329
    %s331 = sadd.s32 %s135, 1
    %v332 = vstv %s331
    %vm333 = vcmp.eq.s32.totalorder %v69, %v332
    %v334 = vld [vmem:[#allocation4] sm:$0xff]
    %v335 = vsel %vm333, 1, 0
    %336 = vset.pattern.permute.xlu0 0
    %337 = vperm.xlu0 %336, %v335
    %v338 = vpop.permute.xlu0 %337
    %vm339 = vcmp.eq.s32.totalorder %v338, 1
    %v340 = vsel %vm339, %v330, %v334
    %341 = vst [vmem:[#allocation4] sm:$0xff] %v340
    %s342 = scalar_lea.vmem [#allocation5], 32
    %v343 = vld [vmem:[%s342] sm:$0xff]
    %v344 = vld [vmem:[%s342 + $0x8] sm:$0xff]
    %v345 = vld [vmem:[%s342 + $0x10] sm:$0xff]
    %v346 = vld [vmem:[%s342 + $0x18] sm:$0xff]
    %v347 = vadd.f32 %v343, %v146
    %v348 = vadd.f32 %v344, %v150
    %v349 = vadd.f32 %v345, %v154
    %v350 = vadd.f32 %v346, %v158
    %351 = vmatprep.subr.mxu0 %v72
    %352 = vmatpush1.msra.mxu0 %v71
    %353 = vmatprep.subr.mxu0 %v76
    %354 = vmatpush1.msra.mxu0 %v75
    %355 = vmatprep.subr.mxu0 %v80
    %356 = vmatpush1.msra.mxu0 %v79
    %357 = vmatprep.subr.mxu0 %v84
    %358 = vmatpush1.msra.mxu0 %v83
    %359 = vmatprep.subr.mxu0 %v88
    %360 = vmatpush1.msra.mxu0 %v87
    %361 = vmatprep.subr.mxu0 %v92
    %362 = vmatpush1.msra.mxu0 %v91
    %363 = vmatprep.subr.mxu0 %v96
    %364 = vmatpush1.msra.mxu0 %v95
    %365 = vmatprep.subr.mxu0 %v100
    %366 = vmatpush1.msra.mxu0 %v99
    %367 = vmatprep.subr.mxu0 %v104
    %368 = vmatpush1.msra.mxu0 %v103
    %369 = vmatprep.subr.mxu0 %v108
    %370 = vmatpush1.msra.mxu0 %v107
    %371 = vmatprep.subr.mxu0 %v112
    %372 = vmatpush1.msra.mxu0 %v111
    %373 = vmatprep.subr.mxu0 %v116
    %374 = vmatpush1.msra.mxu0 %v115
    %375 = vmatprep.subr.mxu0 %v120
    %376 = vmatpush1.msra.mxu0 %v119
    %377 = vmatprep.subr.mxu0 %v124
    %378 = vmatpush1.msra.mxu0 %v123
    %379 = vmatprep.subr.mxu0 %v128
    %380 = vmatpush1.msra.mxu0 %v127
    %381 = vmatprep.subr.mxu0 %v132
    %382 = vmatpush1.msra.mxu0 %v131
    %383 = vmatprep.subr.mxu0 0.0
    %384 = vmatpush1.msra.mxu0 0.0
    %385 = vmatprep.subr.mxu0 0.0
    %386 = vmatpush1.msra.mxu0 0.0
    %387 = vmatprep.subr.mxu0 0.0
    %388 = vmatpush1.msra.mxu0 0.0
    %389 = vmatprep.subr.mxu0 0.0
    %390 = vmatpush1.msra.mxu0 0.0
    %391 = vmatprep.subr.mxu0 0.0
    %392 = vmatpush1.msra.mxu0 0.0
    %393 = vmatprep.subr.mxu0 0.0
    %394 = vmatpush1.msra.mxu0 0.0
    %395 = vmatprep.subr.mxu0 0.0
    %396 = vmatpush1.msra.mxu0 0.0
    %397 = vmatprep.subr.mxu0 0.0
    %398 = vmatpush1.msra.mxu0 0.0
    %399 = vmatprep.subr.mxu0 0.0
    %400 = vmatpush1.msra.mxu0 0.0
    %401 = vmatprep.subr.mxu0 0.0
    %402 = vmatpush1.msra.mxu0 0.0
    %403 = vmatprep.subr.mxu0 0.0
    %404 = vmatpush1.msra.mxu0 0.0
    %405 = vmatprep.subr.mxu0 0.0
    %406 = vmatpush1.msra.mxu0 0.0
    %407 = vmatprep.subr.mxu0 0.0
    %408 = vmatpush1.msra.mxu0 0.0
    %409 = vmatprep.subr.mxu0 0.0
    %410 = vmatpush1.msra.mxu0 0.0
    %411 = vmatprep.subr.mxu0 0.0
    %412 = vmatpush1.msra.mxu0 0.0
    %413 = vmatprep.subr.mxu0 0.0
    %414 = vmatpush1.msra.mxu0 0.0
    %415 = vmatprep.mubr.f32.mxu0 0.0
    %416 = vmatmul.mubr.f32.gmra.mrb[0].mxu0 %v330
    %v417 = vpop.f32.mrb[0].mxu0
    %v418 = vadd.f32 0.0, %v417
    %v419 = vpop.f32.mrb[0].mxu0
    %v420 = vadd.f32 0.0, %v419
    %421 = vdwg.mxu0
    %422 = vmatprep.subr.mxu0 %v74
    %423 = vmatpush1.msra.mxu0 %v73
    %424 = vmatprep.subr.mxu0 %v78
    %425 = vmatpush1.msra.mxu0 %v77
    %426 = vmatprep.subr.mxu0 %v82
    %427 = vmatpush1.msra.mxu0 %v81
    %428 = vmatprep.subr.mxu0 %v86
    %429 = vmatpush1.msra.mxu0 %v85
    %430 = vmatprep.subr.mxu0 %v90
    %431 = vmatpush1.msra.mxu0 %v89
    %432 = vmatprep.subr.mxu0 %v94
    %433 = vmatpush1.msra.mxu0 %v93
    %434 = vmatprep.subr.mxu0 %v98
    %435 = vmatpush1.msra.mxu0 %v97
    %436 = vmatprep.subr.mxu0 %v102
    %437 = vmatpush1.msra.mxu0 %v101
    %438 = vmatprep.subr.mxu0 %v106
    %439 = vmatpush1.msra.mxu0 %v105
    %440 = vmatprep.subr.mxu0 %v110
    %441 = vmatpush1.msra.mxu0 %v109
    %442 = vmatprep.subr.mxu0 %v114
    %443 = vmatpush1.msra.mxu0 %v113
    %444 = vmatprep.subr.mxu0 %v118
    %445 = vmatpush1.msra.mxu0 %v117
    %446 = vmatprep.subr.mxu0 %v122
    %447 = vmatpush1.msra.mxu0 %v121
    %448 = vmatprep.subr.mxu0 %v126
    %449 = vmatpush1.msra.mxu0 %v125
    %450 = vmatprep.subr.mxu0 %v130
    %451 = vmatpush1.msra.mxu0 %v129
    %452 = vmatprep.subr.mxu0 %v134
    %453 = vmatpush1.msra.mxu0 %v133
    %454 = vmatprep.subr.mxu0 0.0
    %455 = vmatpush1.msra.mxu0 0.0
    %456 = vmatprep.subr.mxu0 0.0
    %457 = vmatpush1.msra.mxu0 0.0
    %458 = vmatprep.subr.mxu0 0.0
    %459 = vmatpush1.msra.mxu0 0.0
    %460 = vmatprep.subr.mxu0 0.0
    %461 = vmatpush1.msra.mxu0 0.0
    %462 = vmatprep.subr.mxu0 0.0
    %463 = vmatpush1.msra.mxu0 0.0
    %464 = vmatprep.subr.mxu0 0.0
    %465 = vmatpush1.msra.mxu0 0.0
    %466 = vmatprep.subr.mxu0 0.0
    %467 = vmatpush1.msra.mxu0 0.0
    %468 = vmatprep.subr.mxu0 0.0
    %469 = vmatpush1.msra.mxu0 0.0
    %470 = vmatprep.subr.mxu0 0.0
    %471 = vmatpush1.msra.mxu0 0.0
    %472 = vmatprep.subr.mxu0 0.0
    %473 = vmatpush1.msra.mxu0 0.0
    %474 = vmatprep.subr.mxu0 0.0
    %475 = vmatpush1.msra.mxu0 0.0
    %476 = vmatprep.subr.mxu0 0.0
    %477 = vmatpush1.msra.mxu0 0.0
    %478 = vmatprep.subr.mxu0 0.0
    %479 = vmatpush1.msra.mxu0 0.0
    %480 = vmatprep.subr.mxu0 0.0
    %481 = vmatpush1.msra.mxu0 0.0
    %482 = vmatprep.subr.mxu0 0.0
    %483 = vmatpush1.msra.mxu0 0.0
    %484 = vmatprep.subr.mxu0 0.0
    %485 = vmatpush1.msra.mxu0 0.0
    %486 = vmatprep.mubr.f32.mxu0 0.0
    %487 = vmatmul.mubr.f32.gmra.mrb[0].mxu0 %v330
    %v488 = vpop.f32.mrb[0].mxu0
    %v489 = vadd.f32 0.0, %v488
    %v490 = vpop.f32.mrb[0].mxu0
    %v491 = vadd.f32 0.0, %v490
    %492 = vdwg.mxu0
    %v493 = vadd.f32 %v347, %v418
    %v494 = vadd.f32 %v348, %v420
    %v495 = vadd.f32 %v349, %v489
    %v496 = vadd.f32 %v350, %v491
    %v497 = vmul.f32 %v493, 0.5
    %v498 = vmul.f32 %v494, 0.5
    %v499 = vmul.f32 %v495, 0.5
    %v500 = vtanh.pop %v497
    %v501 = vtanh.pop %v498
    %v502 = vtanh.pop %v499
    %v503 = vmul.f32 %v500, 0.5
    %v504 = vmul.f32 %v501, 0.5
    %v505 = vmul.f32 %v502, 0.5
    %v506 = vadd.f32 %v503, 0.5
    %v507 = vadd.f32 %v504, 0.5
    %v508 = vadd.f32 %v505, 0.5
    %v509 = vtanh.pop %v496
    %v510 = vmul.f32 %v507, %v328
    %v511 = vmul.f32 %v506, %v509
    %v512 = vadd.f32 %v510, %v511
    %v513 = vtanh.pop %v512
    %v514 = vmul.f32 %v508, %v513
    %s515 = sadd.s32 %s135, 2
    %v516 = vstv %s515
    %vm517 = vcmp.eq.s32.totalorder %v69, %v516
    %v518 = vld [vmem:[#allocation4] sm:$0xff]
    %v519 = vsel %vm517, 1, 0
    %520 = vset.pattern.permute.xlu0 0
    %521 = vperm.xlu0 %520, %v519
    %v522 = vpop.permute.xlu0 %521
    %vm523 = vcmp.eq.s32.totalorder %v522, 1
    %v524 = vsel %vm523, %v514, %v518
    %525 = vst [vmem:[#allocation4] sm:$0xff] %v524
    %s526 = scalar_lea.vmem [#allocation5], 64
    %v527 = vld [vmem:[%s526] sm:$0xff]
    %v528 = vld [vmem:[%s526 + $0x8] sm:$0xff]
    %v529 = vld [vmem:[%s526 + $0x10] sm:$0xff]
    %v530 = vld [vmem:[%s526 + $0x18] sm:$0xff]
    %v531 = vadd.f32 %v527, %v146
    %v532 = vadd.f32 %v528, %v150
    %v533 = vadd.f32 %v529, %v154
    %v534 = vadd.f32 %v530, %v158
    %535 = vmatprep.subr.mxu0 %v72
    %536 = vmatpush1.msra.mxu0 %v71
    %537 = vmatprep.subr.mxu0 %v76
    %538 = vmatpush1.msra.mxu0 %v75
    %539 = vmatprep.subr.mxu0 %v80
    %540 = vmatpush1.msra.mxu0 %v79
    %541 = vmatprep.subr.mxu0 %v84
    %542 = vmatpush1.msra.mxu0 %v83
    %543 = vmatprep.subr.mxu0 %v88
    %544 = vmatpush1.msra.mxu0 %v87
    %545 = vmatprep.subr.mxu0 %v92
    %546 = vmatpush1.msra.mxu0 %v91
    %547 = vmatprep.subr.mxu0 %v96
    %548 = vmatpush1.msra.mxu0 %v95
    %549 = vmatprep.subr.mxu0 %v100
    %550 = vmatpush1.msra.mxu0 %v99
    %551 = vmatprep.subr.mxu0 %v104
    %552 = vmatpush1.msra.mxu0 %v103
    %553 = vmatprep.subr.mxu0 %v108
    %554 = vmatpush1.msra.mxu0 %v107
    %555 = vmatprep.subr.mxu0 %v112
    %556 = vmatpush1.msra.mxu0 %v111
    %557 = vmatprep.subr.mxu0 %v116
    %558 = vmatpush1.msra.mxu0 %v115
    %559 = vmatprep.subr.mxu0 %v120
    %560 = vmatpush1.msra.mxu0 %v119
    %561 = vmatprep.subr.mxu0 %v124
    %562 = vmatpush1.msra.mxu0 %v123
    %563 = vmatprep.subr.mxu0 %v128
    %564 = vmatpush1.msra.mxu0 %v127
    %565 = vmatprep.subr.mxu0 %v132
    %566 = vmatpush1.msra.mxu0 %v131
    %567 = vmatprep.subr.mxu0 0.0
    %568 = vmatpush1.msra.mxu0 0.0
    %569 = vmatprep.subr.mxu0 0.0
    %570 = vmatpush1.msra.mxu0 0.0
    %571 = vmatprep.subr.mxu0 0.0
    %572 = vmatpush1.msra.mxu0 0.0
    %573 = vmatprep.subr.mxu0 0.0
    %574 = vmatpush1.msra.mxu0 0.0
    %575 = vmatprep.subr.mxu0 0.0
    %576 = vmatpush1.msra.mxu0 0.0
    %577 = vmatprep.subr.mxu0 0.0
    %578 = vmatpush1.msra.mxu0 0.0
    %579 = vmatprep.subr.mxu0 0.0
    %580 = vmatpush1.msra.mxu0 0.0
    %581 = vmatprep.subr.mxu0 0.0
    %582 = vmatpush1.msra.mxu0 0.0
    %583 = vmatprep.subr.mxu0 0.0
    %584 = vmatpush1.msra.mxu0 0.0
    %585 = vmatprep.subr.mxu0 0.0
    %586 = vmatpush1.msra.mxu0 0.0
    %587 = vmatprep.subr.mxu0 0.0
    %588 = vmatpush1.msra.mxu0 0.0
    %589 = vmatprep.subr.mxu0 0.0
    %590 = vmatpush1.msra.mxu0 0.0
    %591 = vmatprep.subr.mxu0 0.0
    %592 = vmatpush1.msra.mxu0 0.0
    %593 = vmatprep.subr.mxu0 0.0
    %594 = vmatpush1.msra.mxu0 0.0
    %595 = vmatprep.subr.mxu0 0.0
    %596 = vmatpush1.msra.mxu0 0.0
    %597 = vmatprep.subr.mxu0 0.0
    %598 = vmatpush1.msra.mxu0 0.0
    %599 = vmatprep.mubr.f32.mxu0 0.0
    %600 = vmatmul.mubr.f32.gmra.mrb[0].mxu0 %v514
    %v601 = vpop.f32.mrb[0].mxu0
    %v602 = vadd.f32 0.0, %v601
    %v603 = vpop.f32.mrb[0].mxu0
    %v604 = vadd.f32 0.0, %v603
    %605 = vdwg.mxu0
    %606 = vmatprep.subr.mxu0 %v74
    %607 = vmatpush1.msra.mxu0 %v73
    %608 = vmatprep.subr.mxu0 %v78
    %609 = vmatpush1.msra.mxu0 %v77
    %610 = vmatprep.subr.mxu0 %v82
    %611 = vmatpush1.msra.mxu0 %v81
    %612 = vmatprep.subr.mxu0 %v86
    %613 = vmatpush1.msra.mxu0 %v85
    %614 = vmatprep.subr.mxu0 %v90
    %615 = vmatpush1.msra.mxu0 %v89
    %616 = vmatprep.subr.mxu0 %v94
    %617 = vmatpush1.msra.mxu0 %v93
    %618 = vmatprep.subr.mxu0 %v98
    %619 = vmatpush1.msra.mxu0 %v97
    %620 = vmatprep.subr.mxu0 %v102
    %621 = vmatpush1.msra.mxu0 %v101
    %622 = vmatprep.subr.mxu0 %v106
    %623 = vmatpush1.msra.mxu0 %v105
    %624 = vmatprep.subr.mxu0 %v110
    %625 = vmatpush1.msra.mxu0 %v109
    %626 = vmatprep.subr.mxu0 %v114
    %627 = vmatpush1.msra.mxu0 %v113
    %628 = vmatprep.subr.mxu0 %v118
    %629 = vmatpush1.msra.mxu0 %v117
    %630 = vmatprep.subr.mxu0 %v122
    %631 = vmatpush1.msra.mxu0 %v121
    %632 = vmatprep.subr.mxu0 %v126
    %633 = vmatpush1.msra.mxu0 %v125
    %634 = vmatprep.subr.mxu0 %v130
    %635 = vmatpush1.msra.mxu0 %v129
    %636 = vmatprep.subr.mxu0 %v134
    %637 = vmatpush1.msra.mxu0 %v133
    %638 = vmatprep.subr.mxu0 0.0
    %639 = vmatpush1.msra.mxu0 0.0
    %640 = vmatprep.subr.mxu0 0.0
    %641 = vmatpush1.msra.mxu0 0.0
    %642 = vmatprep.subr.mxu0 0.0
    %643 = vmatpush1.msra.mxu0 0.0
    %644 = vmatprep.subr.mxu0 0.0
    %645 = vmatpush1.msra.mxu0 0.0
    %646 = vmatprep.subr.mxu0 0.0
    %647 = vmatpush1.msra.mxu0 0.0
    %648 = vmatprep.subr.mxu0 0.0
    %649 = vmatpush1.msra.mxu0 0.0
    %650 = vmatprep.subr.mxu0 0.0
    %651 = vmatpush1.msra.mxu0 0.0
    %652 = vmatprep.subr.mxu0 0.0
    %653 = vmatpush1.msra.mxu0 0.0
    %654 = vmatprep.subr.mxu0 0.0
    %655 = vmatpush1.msra.mxu0 0.0
    %656 = vmatprep.subr.mxu0 0.0
    %657 = vmatpush1.msra.mxu0 0.0
    %658 = vmatprep.subr.mxu0 0.0
    %659 = vmatpush1.msra.mxu0 0.0
    %660 = vmatprep.subr.mxu0 0.0
    %661 = vmatpush1.msra.mxu0 0.0
    %662 = vmatprep.subr.mxu0 0.0
    %663 = vmatpush1.msra.mxu0 0.0
    %664 = vmatprep.subr.mxu0 0.0
    %665 = vmatpush1.msra.mxu0 0.0
    %666 = vmatprep.subr.mxu0 0.0
    %667 = vmatpush1.msra.mxu0 0.0
    %668 = vmatprep.subr.mxu0 0.0
    %669 = vmatpush1.msra.mxu0 0.0
    %670 = vmatprep.mubr.f32.mxu0 0.0
    %671 = vmatmul.mubr.f32.gmra.mrb[0].mxu0 %v514
    %v672 = vpop.f32.mrb[0].mxu0
    %v673 = vadd.f32 0.0, %v672
    %v674 = vpop.f32.mrb[0].mxu0
    %v675 = vadd.f32 0.0, %v674
    %676 = vdwg.mxu0
    %v677 = vadd.f32 %v531, %v602
    %v678 = vadd.f32 %v532, %v604
    %v679 = vadd.f32 %v533, %v673
    %v680 = vadd.f32 %v534, %v675
    %v681 = vmul.f32 %v677, 0.5
    %v682 = vmul.f32 %v678, 0.5
    %v683 = vmul.f32 %v679, 0.5
    %v684 = vtanh.pop %v681
    %v685 = vtanh.pop %v682
    %v686 = vtanh.pop %v683
    %v687 = vmul.f32 %v684, 0.5
    %v688 = vmul.f32 %v685, 0.5
    %v689 = vmul.f32 %v686, 0.5
    %v690 = vadd.f32 %v687, 0.5
    %v691 = vadd.f32 %v688, 0.5
    %v692 = vadd.f32 %v689, 0.5
    %v693 = vtanh.pop %v680
    %v694 = vmul.f32 %v691, %v512
    %v695 = vmul.f32 %v690, %v693
    %v696 = vadd.f32 %v694, %v695
    %v697 = vtanh.pop %v696
    %v698 = vmul.f32 %v692, %v697
    %s699 = sadd.s32 %s135, 3
    %v700 = vstv %s699
    %vm701 = vcmp.eq.s32.totalorder %v69, %v700
    %v702 = vld [vmem:[#allocation4] sm:$0xff]
    %v703 = vsel %vm701, 1, 0
    %704 = vset.pattern.permute.xlu0 0
    %705 = vperm.xlu0 %704, %v703
    %v706 = vpop.permute.xlu0 %705
    %vm707 = vcmp.eq.s32.totalorder %v706, 1
    %v708 = vsel %vm707, %v698, %v702
    %709 = vst [vmem:[#allocation4] sm:$0xff] %v708
    %s710 = scalar_lea.vmem [#allocation5], 96
    %v711 = vld [vmem:[%s710] sm:$0xff]
    %v712 = vld [vmem:[%s710 + $0x8] sm:$0xff]
    %v713 = vld [vmem:[%s710 + $0x10] sm:$0xff]
    %v714 = vld [vmem:[%s710 + $0x18] sm:$0xff]
    %v715 = vadd.f32 %v711, %v146
    %v716 = vadd.f32 %v712, %v150
    %v717 = vadd.f32 %v713, %v154
    %v718 = vadd.f32 %v714, %v158
    %719 = vmatprep.subr.mxu0 %v72
    %720 = vmatpush1.msra.mxu0 %v71
    %721 = vmatprep.subr.mxu0 %v76
    %722 = vmatpush1.msra.mxu0 %v75
    %723 = vmatprep.subr.mxu0 %v80
    %724 = vmatpush1.msra.mxu0 %v79
    %725 = vmatprep.subr.mxu0 %v84
    %726 = vmatpush1.msra.mxu0 %v83
    %727 = vmatprep.subr.mxu0 %v88
    %728 = vmatpush1.msra.mxu0 %v87
    %729 = vmatprep.subr.mxu0 %v92
    %730 = vmatpush1.msra.mxu0 %v91
    %731 = vmatprep.subr.mxu0 %v96
    %732 = vmatpush1.msra.mxu0 %v95
    %733 = vmatprep.subr.mxu0 %v100
    %734 = vmatpush1.msra.mxu0 %v99
    %735 = vmatprep.subr.mxu0 %v104
    %736 = vmatpush1.msra.mxu0 %v103
    %737 = vmatprep.subr.mxu0 %v108
    %738 = vmatpush1.msra.mxu0 %v107
    %739 = vmatprep.subr.mxu0 %v112
    %740 = vmatpush1.msra.mxu0 %v111
    %741 = vmatprep.subr.mxu0 %v116
    %742 = vmatpush1.msra.mxu0 %v115
    %743 = vmatprep.subr.mxu0 %v120
    %744 = vmatpush1.msra.mxu0 %v119
    %745 = vmatprep.subr.mxu0 %v124
    %746 = vmatpush1.msra.mxu0 %v123
    %747 = vmatprep.subr.mxu0 %v128
    %748 = vmatpush1.msra.mxu0 %v127
    %749 = vmatprep.subr.mxu0 %v132
    %750 = vmatpush1.msra.mxu0 %v131
    %751 = vmatprep.subr.mxu0 0.0
    %752 = vmatpush1.msra.mxu0 0.0
    %753 = vmatprep.subr.mxu0 0.0
    %754 = vmatpush1.msra.mxu0 0.0
    %755 = vmatprep.subr.mxu0 0.0
    %756 = vmatpush1.msra.mxu0 0.0
    %757 = vmatprep.subr.mxu0 0.0
    %758 = vmatpush1.msra.mxu0 0.0
    %759 = vmatprep.subr.mxu0 0.0
    %760 = vmatpush1.msra.mxu0 0.0
    %761 = vmatprep.subr.mxu0 0.0
    %762 = vmatpush1.msra.mxu0 0.0
    %763 = vmatprep.subr.mxu0 0.0
    %764 = vmatpush1.msra.mxu0 0.0
    %765 = vmatprep.subr.mxu0 0.0
    %766 = vmatpush1.msra.mxu0 0.0
    %767 = vmatprep.subr.mxu0 0.0
    %768 = vmatpush1.msra.mxu0 0.0
    %769 = vmatprep.subr.mxu0 0.0
    %770 = vmatpush1.msra.mxu0 0.0
    %771 = vmatprep.subr.mxu0 0.0
    %772 = vmatpush1.msra.mxu0 0.0
    %773 = vmatprep.subr.mxu0 0.0
    %774 = vmatpush1.msra.mxu0 0.0
    %775 = vmatprep.subr.mxu0 0.0
    %776 = vmatpush1.msra.mxu0 0.0
    %777 = vmatprep.subr.mxu0 0.0
    %778 = vmatpush1.msra.mxu0 0.0
    %779 = vmatprep.subr.mxu0 0.0
    %780 = vmatpush1.msra.mxu0 0.0
    %781 = vmatprep.subr.mxu0 0.0
    %782 = vmatpush1.msra.mxu0 0.0
    %783 = vmatprep.mubr.f32.mxu0 0.0
    %784 = vmatmul.mubr.f32.gmra.mrb[0].mxu0 %v698
    %v785 = vpop.f32.mrb[0].mxu0
    %v786 = vadd.f32 0.0, %v785
    %v787 = vpop.f32.mrb[0].mxu0
    %v788 = vadd.f32 0.0, %v787
    %789 = vdwg.mxu0
    %790 = vmatprep.subr.mxu0 %v74
    %791 = vmatpush1.msra.mxu0 %v73
    %792 = vmatprep.subr.mxu0 %v78
    %793 = vmatpush1.msra.mxu0 %v77
    %794 = vmatprep.subr.mxu0 %v82
    %795 = vmatpush1.msra.mxu0 %v81
    %796 = vmatprep.subr.mxu0 %v86
    %797 = vmatpush1.msra.mxu0 %v85
    %798 = vmatprep.subr.mxu0 %v90
    %799 = vmatpush1.msra.mxu0 %v89
    %800 = vmatprep.subr.mxu0 %v94
    %801 = vmatpush1.msra.mxu0 %v93
    %802 = vmatprep.subr.mxu0 %v98
    %803 = vmatpush1.msra.mxu0 %v97
    %804 = vmatprep.subr.mxu0 %v102
    %805 = vmatpush1.msra.mxu0 %v101
    %806 = vmatprep.subr.mxu0 %v106
    %807 = vmatpush1.msra.mxu0 %v105
    %808 = vmatprep.subr.mxu0 %v110
    %809 = vmatpush1.msra.mxu0 %v109
    %810 = vmatprep.subr.mxu0 %v114
    %811 = vmatpush1.msra.mxu0 %v113
    %812 = vmatprep.subr.mxu0 %v118
    %813 = vmatpush1.msra.mxu0 %v117
    %814 = vmatprep.subr.mxu0 %v122
    %815 = vmatpush1.msra.mxu0 %v121
    %816 = vmatprep.subr.mxu0 %v126
    %817 = vmatpush1.msra.mxu0 %v125
    %818 = vmatprep.subr.mxu0 %v130
    %819 = vmatpush1.msra.mxu0 %v129
    %820 = vmatprep.subr.mxu0 %v134
    %821 = vmatpush1.msra.mxu0 %v133
    %822 = vmatprep.subr.mxu0 0.0
    %823 = vmatpush1.msra.mxu0 0.0
    %824 = vmatprep.subr.mxu0 0.0
    %825 = vmatpush1.msra.mxu0 0.0
    %826 = vmatprep.subr.mxu0 0.0
    %827 = vmatpush1.msra.mxu0 0.0
    %828 = vmatprep.subr.mxu0 0.0
    %829 = vmatpush1.msra.mxu0 0.0
    %830 = vmatprep.subr.mxu0 0.0
    %831 = vmatpush1.msra.mxu0 0.0
    %832 = vmatprep.subr.mxu0 0.0
    %833 = vmatpush1.msra.mxu0 0.0
    %834 = vmatprep.subr.mxu0 0.0
    %835 = vmatpush1.msra.mxu0 0.0
    %836 = vmatprep.subr.mxu0 0.0
    %837 = vmatpush1.msra.mxu0 0.0
    %838 = vmatprep.subr.mxu0 0.0
    %839 = vmatpush1.msra.mxu0 0.0
    %840 = vmatprep.subr.mxu0 0.0
    %841 = vmatpush1.msra.mxu0 0.0
    %842 = vmatprep.subr.mxu0 0.0
    %843 = vmatpush1.msra.mxu0 0.0
    %844 = vmatprep.subr.mxu0 0.0
    %845 = vmatpush1.msra.mxu0 0.0
    %846 = vmatprep.subr.mxu0 0.0
    %847 = vmatpush1.msra.mxu0 0.0
    %848 = vmatprep.subr.mxu0 0.0
    %849 = vmatpush1.msra.mxu0 0.0
    %850 = vmatprep.subr.mxu0 0.0
    %851 = vmatpush1.msra.mxu0 0.0
    %852 = vmatprep.subr.mxu0 0.0
    %853 = vmatpush1.msra.mxu0 0.0
    %854 = vmatprep.mubr.f32.mxu0 0.0
    %855 = vmatmul.mubr.f32.gmra.mrb[0].mxu0 %v698
    %v856 = vpop.f32.mrb[0].mxu0
    %v857 = vadd.f32 0.0, %v856
    %v858 = vpop.f32.mrb[0].mxu0
    %v859 = vadd.f32 0.0, %v858
    %860 = vdwg.mxu0
    %v861 = vadd.f32 %v715, %v786
    %v862 = vadd.f32 %v716, %v788
    %v863 = vadd.f32 %v717, %v857
    %v864 = vadd.f32 %v718, %v859
    %v865 = vmul.f32 %v861, 0.5
    %v866 = vmul.f32 %v862, 0.5
    %v867 = vmul.f32 %v863, 0.5
    %v868 = vtanh.pop %v865
    %v869 = vtanh.pop %v866
    %v870 = vtanh.pop %v867
    %v871 = vmul.f32 %v868, 0.5
    %v872 = vmul.f32 %v869, 0.5
    %v873 = vmul.f32 %v870, 0.5
    %v874 = vadd.f32 %v871, 0.5
    %v875 = vadd.f32 %v872, 0.5
    %v876 = vadd.f32 %v873, 0.5
    %v877 = vtanh.pop %v864
    %v878 = vmul.f32 %v875, %v696
    %v879 = vmul.f32 %v874, %v877
    %v880 = vadd.f32 %v878, %v879
    %v881 = vtanh.pop %v880
    %v882 = vmul.f32 %v876, %v881
    %s883 = sadd.s32 %s135, 4
    %v884 = vstv %s883
    %vm885 = vcmp.eq.s32.totalorder %v69, %v884
    %v886 = vld [vmem:[#allocation4] sm:$0xff]
    %v887 = vsel %vm885, 1, 0
    %888 = vset.pattern.permute.xlu0 0
    %889 = vperm.xlu0 %888, %v887
    %v890 = vpop.permute.xlu0 %889
    %vm891 = vcmp.eq.s32.totalorder %v890, 1
    %v892 = vsel %vm891, %v882, %v886
    %893 = vst [vmem:[#allocation4] sm:$0xff] %v892
    %s894 = scalar_lea.vmem [#allocation5], 128
    %v895 = vld [vmem:[%s894] sm:$0xff]
    %v896 = vld [vmem:[%s894 + $0x8] sm:$0xff]
    %v897 = vld [vmem:[%s894 + $0x10] sm:$0xff]
    %v898 = vld [vmem:[%s894 + $0x18] sm:$0xff]
    %v899 = vadd.f32 %v895, %v146
    %v900 = vadd.f32 %v896, %v150
    %v901 = vadd.f32 %v897, %v154
    %v902 = vadd.f32 %v898, %v158
    %903 = vmatprep.subr.mxu0 %v72
    %904 = vmatpush1.msra.mxu0 %v71
    %905 = vmatprep.subr.mxu0 %v76
    %906 = vmatpush1.msra.mxu0 %v75
    %907 = vmatprep.subr.mxu0 %v80
    %908 = vmatpush1.msra.mxu0 %v79
    %909 = vmatprep.subr.mxu0 %v84
    %910 = vmatpush1.msra.mxu0 %v83
    %911 = vmatprep.subr.mxu0 %v88
    %912 = vmatpush1.msra.mxu0 %v87
    %913 = vmatprep.subr.mxu0 %v92
    %914 = vmatpush1.msra.mxu0 %v91
    %915 = vmatprep.subr.mxu0 %v96
    %916 = vmatpush1.msra.mxu0 %v95
    %917 = vmatprep.subr.mxu0 %v100
    %918 = vmatpush1.msra.mxu0 %v99
    %919 = vmatprep.subr.mxu0 %v104
    %920 = vmatpush1.msra.mxu0 %v103
    %921 = vmatprep.subr.mxu0 %v108
    %922 = vmatpush1.msra.mxu0 %v107
    %923 = vmatprep.subr.mxu0 %v112
    %924 = vmatpush1.msra.mxu0 %v111
    %925 = vmatprep.subr.mxu0 %v116
    %926 = vmatpush1.msra.mxu0 %v115
    %927 = vmatprep.subr.mxu0 %v120
    %928 = vmatpush1.msra.mxu0 %v119
    %929 = vmatprep.subr.mxu0 %v124
    %930 = vmatpush1.msra.mxu0 %v123
    %931 = vmatprep.subr.mxu0 %v128
    %932 = vmatpush1.msra.mxu0 %v127
    %933 = vmatprep.subr.mxu0 %v132
    %934 = vmatpush1.msra.mxu0 %v131
    %935 = vmatprep.subr.mxu0 0.0
    %936 = vmatpush1.msra.mxu0 0.0
    %937 = vmatprep.subr.mxu0 0.0
    %938 = vmatpush1.msra.mxu0 0.0
    %939 = vmatprep.subr.mxu0 0.0
    %940 = vmatpush1.msra.mxu0 0.0
    %941 = vmatprep.subr.mxu0 0.0
    %942 = vmatpush1.msra.mxu0 0.0
    %943 = vmatprep.subr.mxu0 0.0
    %944 = vmatpush1.msra.mxu0 0.0
    %945 = vmatprep.subr.mxu0 0.0
    %946 = vmatpush1.msra.mxu0 0.0
    %947 = vmatprep.subr.mxu0 0.0
    %948 = vmatpush1.msra.mxu0 0.0
    %949 = vmatprep.subr.mxu0 0.0
    %950 = vmatpush1.msra.mxu0 0.0
    %951 = vmatprep.subr.mxu0 0.0
    %952 = vmatpush1.msra.mxu0 0.0
    %953 = vmatprep.subr.mxu0 0.0
    %954 = vmatpush1.msra.mxu0 0.0
    %955 = vmatprep.subr.mxu0 0.0
    %956 = vmatpush1.msra.mxu0 0.0
    %957 = vmatprep.subr.mxu0 0.0
    %958 = vmatpush1.msra.mxu0 0.0
    %959 = vmatprep.subr.mxu0 0.0
    %960 = vmatpush1.msra.mxu0 0.0
    %961 = vmatprep.subr.mxu0 0.0
    %962 = vmatpush1.msra.mxu0 0.0
    %963 = vmatprep.subr.mxu0 0.0
    %964 = vmatpush1.msra.mxu0 0.0
    %965 = vmatprep.subr.mxu0 0.0
    %966 = vmatpush1.msra.mxu0 0.0
    %967 = vmatprep.mubr.f32.mxu0 0.0
    %968 = vmatmul.mubr.f32.gmra.mrb[0].mxu0 %v882
    %v969 = vpop.f32.mrb[0].mxu0
    %v970 = vadd.f32 0.0, %v969
    %v971 = vpop.f32.mrb[0].mxu0
    %v972 = vadd.f32 0.0, %v971
    %973 = vdwg.mxu0
    %974 = vmatprep.subr.mxu0 %v74
    %975 = vmatpush1.msra.mxu0 %v73
    %976 = vmatprep.subr.mxu0 %v78
    %977 = vmatpush1.msra.mxu0 %v77
    %978 = vmatprep.subr.mxu0 %v82
    %979 = vmatpush1.msra.mxu0 %v81
    %980 = vmatprep.subr.mxu0 %v86
    %981 = vmatpush1.msra.mxu0 %v85
    %982 = vmatprep.subr.mxu0 %v90
    %983 = vmatpush1.msra.mxu0 %v89
    %984 = vmatprep.subr.mxu0 %v94
    %985 = vmatpush1.msra.mxu0 %v93
    %986 = vmatprep.subr.mxu0 %v98
    %987 = vmatpush1.msra.mxu0 %v97
    %988 = vmatprep.subr.mxu0 %v102
    %989 = vmatpush1.msra.mxu0 %v101
    %990 = vmatprep.subr.mxu0 %v106
    %991 = vmatpush1.msra.mxu0 %v105
    %992 = vmatprep.subr.mxu0 %v110
    %993 = vmatpush1.msra.mxu0 %v109
    %994 = vmatprep.subr.mxu0 %v114
    %995 = vmatpush1.msra.mxu0 %v113
    %996 = vmatprep.subr.mxu0 %v118
    %997 = vmatpush1.msra.mxu0 %v117
    %998 = vmatprep.subr.mxu0 %v122
    %999 = vmatpush1.msra.mxu0 %v121
    %1000 = vmatprep.subr.mxu0 %v126
    %1001 = vmatpush1.msra.mxu0 %v125
    %1002 = vmatprep.subr.mxu0 %v130
    %1003 = vmatpush1.msra.mxu0 %v129
    %1004 = vmatprep.subr.mxu0 %v134
    %1005 = vmatpush1.msra.mxu0 %v133
    %1006 = vmatprep.subr.mxu0 0.0
    %1007 = vmatpush1.msra.mxu0 0.0
    %1008 = vmatprep.subr.mxu0 0.0
    %1009 = vmatpush1.msra.mxu0 0.0
    %1010 = vmatprep.subr.mxu0 0.0
    %1011 = vmatpush1.msra.mxu0 0.0
    %1012 = vmatprep.subr.mxu0 0.0
    %1013 = vmatpush1.msra.mxu0 0.0
    %1014 = vmatprep.subr.mxu0 0.0
    %1015 = vmatpush1.msra.mxu0 0.0
    %1016 = vmatprep.subr.mxu0 0.0
    %1017 = vmatpush1.msra.mxu0 0.0
    %1018 = vmatprep.subr.mxu0 0.0
    %1019 = vmatpush1.msra.mxu0 0.0
    %1020 = vmatprep.subr.mxu0 0.0
    %1021 = vmatpush1.msra.mxu0 0.0
    %1022 = vmatprep.subr.mxu0 0.0
    %1023 = vmatpush1.msra.mxu0 0.0
    %1024 = vmatprep.subr.mxu0 0.0
    %1025 = vmatpush1.msra.mxu0 0.0
    %1026 = vmatprep.subr.mxu0 0.0
    %1027 = vmatpush1.msra.mxu0 0.0
    %1028 = vmatprep.subr.mxu0 0.0
    %1029 = vmatpush1.msra.mxu0 0.0
    %1030 = vmatprep.subr.mxu0 0.0
    %1031 = vmatpush1.msra.mxu0 0.0
    %1032 = vmatprep.subr.mxu0 0.0
    %1033 = vmatpush1.msra.mxu0 0.0
    %1034 = vmatprep.subr.mxu0 0.0
    %1035 = vmatpush1.msra.mxu0 0.0
    %1036 = vmatprep.subr.mxu0 0.0
    %1037 = vmatpush1.msra.mxu0 0.0
    %1038 = vmatprep.mubr.f32.mxu0 0.0
    %1039 = vmatmul.mubr.f32.gmra.mrb[0].mxu0 %v882
    %v1040 = vpop.f32.mrb[0].mxu0
    %v1041 = vadd.f32 0.0, %v1040
    %v1042 = vpop.f32.mrb[0].mxu0
    %v1043 = vadd.f32 0.0, %v1042
    %1044 = vdwg.mxu0
    %v1045 = vadd.f32 %v899, %v970
    %v1046 = vadd.f32 %v900, %v972
    %v1047 = vadd.f32 %v901, %v1041
    %v1048 = vadd.f32 %v902, %v1043
    %v1049 = vmul.f32 %v1045, 0.5
    %v1050 = vmul.f32 %v1046, 0.5
    %v1051 = vmul.f32 %v1047, 0.5
    %v1052 = vtanh.pop %v1049
    %v1053 = vtanh.pop %v1050
    %v1054 = vtanh.pop %v1051
    %v1055 = vmul.f32 %v1052, 0.5
    %v1056 = vmul.f32 %v1053, 0.5
    %v1057 = vmul.f32 %v1054, 0.5
    %v1058 = vadd.f32 %v1055, 0.5
    %v1059 = vadd.f32 %v1056, 0.5
    %v1060 = vadd.f32 %v1057, 0.5
    %v1061 = vtanh.pop %v1048
    %v1062 = vmul.f32 %v1059, %v880
    %v1063 = vmul.f32 %v1058, %v1061
    %v1064 = vadd.f32 %v1062, %v1063
    %v1065 = vtanh.pop %v1064
    %v1066 = vmul.f32 %v1060, %v1065
    %s1067 = sadd.s32 %s135, 5
    %v1068 = vstv %s1067
    %vm1069 = vcmp.eq.s32.totalorder %v69, %v1068
    %v1070 = vld [vmem:[#allocation4] sm:$0xff]
    %v1071 = vsel %vm1069, 1, 0
    %1072 = vset.pattern.permute.xlu0 0
    %1073 = vperm.xlu0 %1072, %v1071
    %v1074 = vpop.permute.xlu0 %1073
    %vm1075 = vcmp.eq.s32.totalorder %v1074, 1
    %v1076 = vsel %vm1075, %v1066, %v1070
    %1077 = vst [vmem:[#allocation4] sm:$0xff] %v1076
    %s1078 = scalar_lea.vmem [#allocation5], 160
    %v1079 = vld [vmem:[%s1078] sm:$0xff]
    %v1080 = vld [vmem:[%s1078 + $0x8] sm:$0xff]
    %v1081 = vld [vmem:[%s1078 + $0x10] sm:$0xff]
    %v1082 = vld [vmem:[%s1078 + $0x18] sm:$0xff]
    %v1083 = vadd.f32 %v1079, %v146
    %v1084 = vadd.f32 %v1080, %v150
    %v1085 = vadd.f32 %v1081, %v154
    %v1086 = vadd.f32 %v1082, %v158
    %1087 = vmatprep.subr.mxu0 %v72
    %1088 = vmatpush1.msra.mxu0 %v71
    %1089 = vmatprep.subr.mxu0 %v76
    %1090 = vmatpush1.msra.mxu0 %v75
    %1091 = vmatprep.subr.mxu0 %v80
    %1092 = vmatpush1.msra.mxu0 %v79
    %1093 = vmatprep.subr.mxu0 %v84
    %1094 = vmatpush1.msra.mxu0 %v83
    %1095 = vmatprep.subr.mxu0 %v88
    %1096 = vmatpush1.msra.mxu0 %v87
    %1097 = vmatprep.subr.mxu0 %v92
    %1098 = vmatpush1.msra.mxu0 %v91
    %1099 = vmatprep.subr.mxu0 %v96
    %1100 = vmatpush1.msra.mxu0 %v95
    %1101 = vmatprep.subr.mxu0 %v100
    %1102 = vmatpush1.msra.mxu0 %v99
    %1103 = vmatprep.subr.mxu0 %v104
    %1104 = vmatpush1.msra.mxu0 %v103
    %1105 = vmatprep.subr.mxu0 %v108
    %1106 = vmatpush1.msra.mxu0 %v107
    %1107 = vmatprep.subr.mxu0 %v112
    %1108 = vmatpush1.msra.mxu0 %v111
    %1109 = vmatprep.subr.mxu0 %v116
    %1110 = vmatpush1.msra.mxu0 %v115
    %1111 = vmatprep.subr.mxu0 %v120
    %1112 = vmatpush1.msra.mxu0 %v119
    %1113 = vmatprep.subr.mxu0 %v124
    %1114 = vmatpush1.msra.mxu0 %v123
    %1115 = vmatprep.subr.mxu0 %v128
    %1116 = vmatpush1.msra.mxu0 %v127
    %1117 = vmatprep.subr.mxu0 %v132
    %1118 = vmatpush1.msra.mxu0 %v131
    %1119 = vmatprep.subr.mxu0 0.0
    %1120 = vmatpush1.msra.mxu0 0.0
    %1121 = vmatprep.subr.mxu0 0.0
    %1122 = vmatpush1.msra.mxu0 0.0
    %1123 = vmatprep.subr.mxu0 0.0
    %1124 = vmatpush1.msra.mxu0 0.0
    %1125 = vmatprep.subr.mxu0 0.0
    %1126 = vmatpush1.msra.mxu0 0.0
    %1127 = vmatprep.subr.mxu0 0.0
    %1128 = vmatpush1.msra.mxu0 0.0
    %1129 = vmatprep.subr.mxu0 0.0
    %1130 = vmatpush1.msra.mxu0 0.0
    %1131 = vmatprep.subr.mxu0 0.0
    %1132 = vmatpush1.msra.mxu0 0.0
    %1133 = vmatprep.subr.mxu0 0.0
    %1134 = vmatpush1.msra.mxu0 0.0
    %1135 = vmatprep.subr.mxu0 0.0
    %1136 = vmatpush1.msra.mxu0 0.0
    %1137 = vmatprep.subr.mxu0 0.0
    %1138 = vmatpush1.msra.mxu0 0.0
    %1139 = vmatprep.subr.mxu0 0.0
    %1140 = vmatpush1.msra.mxu0 0.0
    %1141 = vmatprep.subr.mxu0 0.0
    %1142 = vmatpush1.msra.mxu0 0.0
    %1143 = vmatprep.subr.mxu0 0.0
    %1144 = vmatpush1.msra.mxu0 0.0
    %1145 = vmatprep.subr.mxu0 0.0
    %1146 = vmatpush1.msra.mxu0 0.0
    %1147 = vmatprep.subr.mxu0 0.0
    %1148 = vmatpush1.msra.mxu0 0.0
    %1149 = vmatprep.subr.mxu0 0.0
    %1150 = vmatpush1.msra.mxu0 0.0
    %1151 = vmatprep.mubr.f32.mxu0 0.0
    %1152 = vmatmul.mubr.f32.gmra.mrb[0].mxu0 %v1066
    %v1153 = vpop.f32.mrb[0].mxu0
    %v1154 = vadd.f32 0.0, %v1153
    %v1155 = vpop.f32.mrb[0].mxu0
    %v1156 = vadd.f32 0.0, %v1155
    %1157 = vdwg.mxu0
    %1158 = vmatprep.subr.mxu0 %v74
    %1159 = vmatpush1.msra.mxu0 %v73
    %1160 = vmatprep.subr.mxu0 %v78
    %1161 = vmatpush1.msra.mxu0 %v77
    %1162 = vmatprep.subr.mxu0 %v82
    %1163 = vmatpush1.msra.mxu0 %v81
    %1164 = vmatprep.subr.mxu0 %v86
    %1165 = vmatpush1.msra.mxu0 %v85
    %1166 = vmatprep.subr.mxu0 %v90
    %1167 = vmatpush1.msra.mxu0 %v89
    %1168 = vmatprep.subr.mxu0 %v94
    %1169 = vmatpush1.msra.mxu0 %v93
    %1170 = vmatprep.subr.mxu0 %v98
    %1171 = vmatpush1.msra.mxu0 %v97
    %1172 = vmatprep.subr.mxu0 %v102
    %1173 = vmatpush1.msra.mxu0 %v101
    %1174 = vmatprep.subr.mxu0 %v106
    %1175 = vmatpush1.msra.mxu0 %v105
    %1176 = vmatprep.subr.mxu0 %v110
    %1177 = vmatpush1.msra.mxu0 %v109
    %1178 = vmatprep.subr.mxu0 %v114
    %1179 = vmatpush1.msra.mxu0 %v113
    %1180 = vmatprep.subr.mxu0 %v118
    %1181 = vmatpush1.msra.mxu0 %v117
    %1182 = vmatprep.subr.mxu0 %v122
    %1183 = vmatpush1.msra.mxu0 %v121
    %1184 = vmatprep.subr.mxu0 %v126
    %1185 = vmatpush1.msra.mxu0 %v125
    %1186 = vmatprep.subr.mxu0 %v130
    %1187 = vmatpush1.msra.mxu0 %v129
    %1188 = vmatprep.subr.mxu0 %v134
    %1189 = vmatpush1.msra.mxu0 %v133
    %1190 = vmatprep.subr.mxu0 0.0
    %1191 = vmatpush1.msra.mxu0 0.0
    %1192 = vmatprep.subr.mxu0 0.0
    %1193 = vmatpush1.msra.mxu0 0.0
    %1194 = vmatprep.subr.mxu0 0.0
    %1195 = vmatpush1.msra.mxu0 0.0
    %1196 = vmatprep.subr.mxu0 0.0
    %1197 = vmatpush1.msra.mxu0 0.0
    %1198 = vmatprep.subr.mxu0 0.0
    %1199 = vmatpush1.msra.mxu0 0.0
    %1200 = vmatprep.subr.mxu0 0.0
    %1201 = vmatpush1.msra.mxu0 0.0
    %1202 = vmatprep.subr.mxu0 0.0
    %1203 = vmatpush1.msra.mxu0 0.0
    %1204 = vmatprep.subr.mxu0 0.0
    %1205 = vmatpush1.msra.mxu0 0.0
    %1206 = vmatprep.subr.mxu0 0.0
    %1207 = vmatpush1.msra.mxu0 0.0
    %1208 = vmatprep.subr.mxu0 0.0
    %1209 = vmatpush1.msra.mxu0 0.0
    %1210 = vmatprep.subr.mxu0 0.0
    %1211 = vmatpush1.msra.mxu0 0.0
    %1212 = vmatprep.subr.mxu0 0.0
    %1213 = vmatpush1.msra.mxu0 0.0
    %1214 = vmatprep.subr.mxu0 0.0
    %1215 = vmatpush1.msra.mxu0 0.0
    %1216 = vmatprep.subr.mxu0 0.0
    %1217 = vmatpush1.msra.mxu0 0.0
    %1218 = vmatprep.subr.mxu0 0.0
    %1219 = vmatpush1.msra.mxu0 0.0
    %1220 = vmatprep.subr.mxu0 0.0
    %1221 = vmatpush1.msra.mxu0 0.0
    %1222 = vmatprep.mubr.f32.mxu0 0.0
    %1223 = vmatmul.mubr.f32.gmra.mrb[0].mxu0 %v1066
    %v1224 = vpop.f32.mrb[0].mxu0
    %v1225 = vadd.f32 0.0, %v1224
    %v1226 = vpop.f32.mrb[0].mxu0
    %v1227 = vadd.f32 0.0, %v1226
    %1228 = vdwg.mxu0
    %v1229 = vadd.f32 %v1083, %v1154
    %v1230 = vadd.f32 %v1084, %v1156
    %v1231 = vadd.f32 %v1085, %v1225
    %v1232 = vadd.f32 %v1086, %v1227
    %v1233 = vmul.f32 %v1229, 0.5
    %v1234 = vmul.f32 %v1230, 0.5
    %v1235 = vmul.f32 %v1231, 0.5
    %v1236 = vtanh.pop %v1233
    %v1237 = vtanh.pop %v1234
    %v1238 = vtanh.pop %v1235
    %v1239 = vmul.f32 %v1236, 0.5
    %v1240 = vmul.f32 %v1237, 0.5
    %v1241 = vmul.f32 %v1238, 0.5
    %v1242 = vadd.f32 %v1239, 0.5
    %v1243 = vadd.f32 %v1240, 0.5
    %v1244 = vadd.f32 %v1241, 0.5
    %v1245 = vtanh.pop %v1232
    %v1246 = vmul.f32 %v1243, %v1064
    %v1247 = vmul.f32 %v1242, %v1245
    %v1248 = vadd.f32 %v1246, %v1247
    %v1249 = vtanh.pop %v1248
    %v1250 = vmul.f32 %v1244, %v1249
    %s1251 = sadd.s32 %s135, 6
    %v1252 = vstv %s1251
    %vm1253 = vcmp.eq.s32.totalorder %v69, %v1252
    %v1254 = vld [vmem:[#allocation4] sm:$0xff]
    %v1255 = vsel %vm1253, 1, 0
    %1256 = vset.pattern.permute.xlu0 0
    %1257 = vperm.xlu0 %1256, %v1255
    %v1258 = vpop.permute.xlu0 %1257
    %vm1259 = vcmp.eq.s32.totalorder %v1258, 1
    %v1260 = vsel %vm1259, %v1250, %v1254
    %1261 = vst [vmem:[#allocation4] sm:$0xff] %v1260
    %s1262 = scalar_lea.vmem [#allocation5], 192
    %v1263 = vld [vmem:[%s1262] sm:$0xff]
    %v1264 = vld [vmem:[%s1262 + $0x8] sm:$0xff]
    %v1265 = vld [vmem:[%s1262 + $0x10] sm:$0xff]
    %v1266 = vld [vmem:[%s1262 + $0x18] sm:$0xff]
    %v1267 = vadd.f32 %v1263, %v146
    %v1268 = vadd.f32 %v1264, %v150
    %v1269 = vadd.f32 %v1265, %v154
    %v1270 = vadd.f32 %v1266, %v158
    %1271 = vmatprep.subr.mxu0 %v72
    %1272 = vmatpush1.msra.mxu0 %v71
    %1273 = vmatprep.subr.mxu0 %v76
    %1274 = vmatpush1.msra.mxu0 %v75
    %1275 = vmatprep.subr.mxu0 %v80
    %1276 = vmatpush1.msra.mxu0 %v79
    %1277 = vmatprep.subr.mxu0 %v84
    %1278 = vmatpush1.msra.mxu0 %v83
    %1279 = vmatprep.subr.mxu0 %v88
    %1280 = vmatpush1.msra.mxu0 %v87
    %1281 = vmatprep.subr.mxu0 %v92
    %1282 = vmatpush1.msra.mxu0 %v91
    %1283 = vmatprep.subr.mxu0 %v96
    %1284 = vmatpush1.msra.mxu0 %v95
    %1285 = vmatprep.subr.mxu0 %v100
    %1286 = vmatpush1.msra.mxu0 %v99
    %1287 = vmatprep.subr.mxu0 %v104
    %1288 = vmatpush1.msra.mxu0 %v103
    %1289 = vmatprep.subr.mxu0 %v108
    %1290 = vmatpush1.msra.mxu0 %v107
    %1291 = vmatprep.subr.mxu0 %v112
    %1292 = vmatpush1.msra.mxu0 %v111
    %1293 = vmatprep.subr.mxu0 %v116
    %1294 = vmatpush1.msra.mxu0 %v115
    %1295 = vmatprep.subr.mxu0 %v120
    %1296 = vmatpush1.msra.mxu0 %v119
    %1297 = vmatprep.subr.mxu0 %v124
    %1298 = vmatpush1.msra.mxu0 %v123
    %1299 = vmatprep.subr.mxu0 %v128
    %1300 = vmatpush1.msra.mxu0 %v127
    %1301 = vmatprep.subr.mxu0 %v132
    %1302 = vmatpush1.msra.mxu0 %v131
    %1303 = vmatprep.subr.mxu0 0.0
    %1304 = vmatpush1.msra.mxu0 0.0
    %1305 = vmatprep.subr.mxu0 0.0
    %1306 = vmatpush1.msra.mxu0 0.0
    %1307 = vmatprep.subr.mxu0 0.0
    %1308 = vmatpush1.msra.mxu0 0.0
    %1309 = vmatprep.subr.mxu0 0.0
    %1310 = vmatpush1.msra.mxu0 0.0
    %1311 = vmatprep.subr.mxu0 0.0
    %1312 = vmatpush1.msra.mxu0 0.0
    %1313 = vmatprep.subr.mxu0 0.0
    %1314 = vmatpush1.msra.mxu0 0.0
    %1315 = vmatprep.subr.mxu0 0.0
    %1316 = vmatpush1.msra.mxu0 0.0
    %1317 = vmatprep.subr.mxu0 0.0
    %1318 = vmatpush1.msra.mxu0 0.0
    %1319 = vmatprep.subr.mxu0 0.0
    %1320 = vmatpush1.msra.mxu0 0.0
    %1321 = vmatprep.subr.mxu0 0.0
    %1322 = vmatpush1.msra.mxu0 0.0
    %1323 = vmatprep.subr.mxu0 0.0
    %1324 = vmatpush1.msra.mxu0 0.0
    %1325 = vmatprep.subr.mxu0 0.0
    %1326 = vmatpush1.msra.mxu0 0.0
    %1327 = vmatprep.subr.mxu0 0.0
    %1328 = vmatpush1.msra.mxu0 0.0
    %1329 = vmatprep.subr.mxu0 0.0
    %1330 = vmatpush1.msra.mxu0 0.0
    %1331 = vmatprep.subr.mxu0 0.0
    %1332 = vmatpush1.msra.mxu0 0.0
    %1333 = vmatprep.subr.mxu0 0.0
    %1334 = vmatpush1.msra.mxu0 0.0
    %1335 = vmatprep.mubr.f32.mxu0 0.0
    %1336 = vmatmul.mubr.f32.gmra.mrb[0].mxu0 %v1250
    %v1337 = vpop.f32.mrb[0].mxu0
    %v1338 = vadd.f32 0.0, %v1337
    %v1339 = vpop.f32.mrb[0].mxu0
    %v1340 = vadd.f32 0.0, %v1339
    %1341 = vdwg.mxu0
    %1342 = vmatprep.subr.mxu0 %v74
    %1343 = vmatpush1.msra.mxu0 %v73
    %1344 = vmatprep.subr.mxu0 %v78
    %1345 = vmatpush1.msra.mxu0 %v77
    %1346 = vmatprep.subr.mxu0 %v82
    %1347 = vmatpush1.msra.mxu0 %v81
    %1348 = vmatprep.subr.mxu0 %v86
    %1349 = vmatpush1.msra.mxu0 %v85
    %1350 = vmatprep.subr.mxu0 %v90
    %1351 = vmatpush1.msra.mxu0 %v89
    %1352 = vmatprep.subr.mxu0 %v94
    %1353 = vmatpush1.msra.mxu0 %v93
    %1354 = vmatprep.subr.mxu0 %v98
    %1355 = vmatpush1.msra.mxu0 %v97
    %1356 = vmatprep.subr.mxu0 %v102
    %1357 = vmatpush1.msra.mxu0 %v101
    %1358 = vmatprep.subr.mxu0 %v106
    %1359 = vmatpush1.msra.mxu0 %v105
    %1360 = vmatprep.subr.mxu0 %v110
    %1361 = vmatpush1.msra.mxu0 %v109
    %1362 = vmatprep.subr.mxu0 %v114
    %1363 = vmatpush1.msra.mxu0 %v113
    %1364 = vmatprep.subr.mxu0 %v118
    %1365 = vmatpush1.msra.mxu0 %v117
    %1366 = vmatprep.subr.mxu0 %v122
    %1367 = vmatpush1.msra.mxu0 %v121
    %1368 = vmatprep.subr.mxu0 %v126
    %1369 = vmatpush1.msra.mxu0 %v125
    %1370 = vmatprep.subr.mxu0 %v130
    %1371 = vmatpush1.msra.mxu0 %v129
    %1372 = vmatprep.subr.mxu0 %v134
    %1373 = vmatpush1.msra.mxu0 %v133
    %1374 = vmatprep.subr.mxu0 0.0
    %1375 = vmatpush1.msra.mxu0 0.0
    %1376 = vmatprep.subr.mxu0 0.0
    %1377 = vmatpush1.msra.mxu0 0.0
    %1378 = vmatprep.subr.mxu0 0.0
    %1379 = vmatpush1.msra.mxu0 0.0
    %1380 = vmatprep.subr.mxu0 0.0
    %1381 = vmatpush1.msra.mxu0 0.0
    %1382 = vmatprep.subr.mxu0 0.0
    %1383 = vmatpush1.msra.mxu0 0.0
    %1384 = vmatprep.subr.mxu0 0.0
    %1385 = vmatpush1.msra.mxu0 0.0
    %1386 = vmatprep.subr.mxu0 0.0
    %1387 = vmatpush1.msra.mxu0 0.0
    %1388 = vmatprep.subr.mxu0 0.0
    %1389 = vmatpush1.msra.mxu0 0.0
    %1390 = vmatprep.subr.mxu0 0.0
    %1391 = vmatpush1.msra.mxu0 0.0
    %1392 = vmatprep.subr.mxu0 0.0
    %1393 = vmatpush1.msra.mxu0 0.0
    %1394 = vmatprep.subr.mxu0 0.0
    %1395 = vmatpush1.msra.mxu0 0.0
    %1396 = vmatprep.subr.mxu0 0.0
    %1397 = vmatpush1.msra.mxu0 0.0
    %1398 = vmatprep.subr.mxu0 0.0
    %1399 = vmatpush1.msra.mxu0 0.0
    %1400 = vmatprep.subr.mxu0 0.0
    %1401 = vmatpush1.msra.mxu0 0.0
    %1402 = vmatprep.subr.mxu0 0.0
    %1403 = vmatpush1.msra.mxu0 0.0
    %1404 = vmatprep.subr.mxu0 0.0
    %1405 = vmatpush1.msra.mxu0 0.0
    %1406 = vmatprep.mubr.f32.mxu0 0.0
    %1407 = vmatmul.mubr.f32.gmra.mrb[0].mxu0 %v1250
    %v1408 = vpop.f32.mrb[0].mxu0
    %v1409 = vadd.f32 0.0, %v1408
    %v1410 = vpop.f32.mrb[0].mxu0
    %v1411 = vadd.f32 0.0, %v1410
    %1412 = vdwg.mxu0
    %v1413 = vadd.f32 %v1267, %v1338
    %v1414 = vadd.f32 %v1268, %v1340
    %v1415 = vadd.f32 %v1269, %v1409
    %v1416 = vadd.f32 %v1270, %v1411
    %v1417 = vmul.f32 %v1413, 0.5
    %v1418 = vmul.f32 %v1414, 0.5
    %v1419 = vmul.f32 %v1415, 0.5
    %v1420 = vtanh.pop %v1417
    %v1421 = vtanh.pop %v1418
    %v1422 = vtanh.pop %v1419
    %v1423 = vmul.f32 %v1420, 0.5
    %v1424 = vmul.f32 %v1421, 0.5
    %v1425 = vmul.f32 %v1422, 0.5
    %v1426 = vadd.f32 %v1423, 0.5
    %v1427 = vadd.f32 %v1424, 0.5
    %v1428 = vadd.f32 %v1425, 0.5
    %v1429 = vtanh.pop %v1416
    %v1430 = vmul.f32 %v1427, %v1248
    %v1431 = vmul.f32 %v1426, %v1429
    %v1432 = vadd.f32 %v1430, %v1431
    %v1433 = vtanh.pop %v1432
    %v1434 = vmul.f32 %v1428, %v1433
    %s1435 = sadd.s32 %s135, 7
    %v1436 = vstv %s1435
    %vm1437 = vcmp.eq.s32.totalorder %v69, %v1436
    %v1438 = vld [vmem:[#allocation4] sm:$0xff]
    %v1439 = vsel %vm1437, 1, 0
    %1440 = vset.pattern.permute.xlu0 0
    %1441 = vperm.xlu0 %1440, %v1439
    %v1442 = vpop.permute.xlu0 %1441
    %vm1443 = vcmp.eq.s32.totalorder %v1442, 1
    %v1444 = vsel %vm1443, %v1434, %v1438
    %1445 = vst [vmem:[#allocation4] sm:$0xff] %v1444
    %s1446 = scalar_lea.vmem [#allocation5], 224
    %v1447 = vld [vmem:[%s1446] sm:$0xff]
    %v1448 = vld [vmem:[%s1446 + $0x8] sm:$0xff]
    %v1449 = vld [vmem:[%s1446 + $0x10] sm:$0xff]
    %v1450 = vld [vmem:[%s1446 + $0x18] sm:$0xff]
    %v1451 = vadd.f32 %v1447, %v146
    %v1452 = vadd.f32 %v1448, %v150
    %v1453 = vadd.f32 %v1449, %v154
    %v1454 = vadd.f32 %v1450, %v158
    %1455 = vmatprep.subr.mxu0 %v72
    %1456 = vmatpush1.msra.mxu0 %v71
    %1457 = vmatprep.subr.mxu0 %v76
    %1458 = vmatpush1.msra.mxu0 %v75
    %1459 = vmatprep.subr.mxu0 %v80
    %1460 = vmatpush1.msra.mxu0 %v79
    %1461 = vmatprep.subr.mxu0 %v84
    %1462 = vmatpush1.msra.mxu0 %v83
    %1463 = vmatprep.subr.mxu0 %v88
    %1464 = vmatpush1.msra.mxu0 %v87
    %1465 = vmatprep.subr.mxu0 %v92
    %1466 = vmatpush1.msra.mxu0 %v91
    %1467 = vmatprep.subr.mxu0 %v96
    %1468 = vmatpush1.msra.mxu0 %v95
    %1469 = vmatprep.subr.mxu0 %v100
    %1470 = vmatpush1.msra.mxu0 %v99
    %1471 = vmatprep.subr.mxu0 %v104
    %1472 = vmatpush1.msra.mxu0 %v103
    %1473 = vmatprep.subr.mxu0 %v108
    %1474 = vmatpush1.msra.mxu0 %v107
    %1475 = vmatprep.subr.mxu0 %v112
    %1476 = vmatpush1.msra.mxu0 %v111
    %1477 = vmatprep.subr.mxu0 %v116
    %1478 = vmatpush1.msra.mxu0 %v115
    %1479 = vmatprep.subr.mxu0 %v120
    %1480 = vmatpush1.msra.mxu0 %v119
    %1481 = vmatprep.subr.mxu0 %v124
    %1482 = vmatpush1.msra.mxu0 %v123
    %1483 = vmatprep.subr.mxu0 %v128
    %1484 = vmatpush1.msra.mxu0 %v127
    %1485 = vmatprep.subr.mxu0 %v132
    %1486 = vmatpush1.msra.mxu0 %v131
    %1487 = vmatprep.subr.mxu0 0.0
    %1488 = vmatpush1.msra.mxu0 0.0
    %1489 = vmatprep.subr.mxu0 0.0
    %1490 = vmatpush1.msra.mxu0 0.0
    %1491 = vmatprep.subr.mxu0 0.0
    %1492 = vmatpush1.msra.mxu0 0.0
    %1493 = vmatprep.subr.mxu0 0.0
    %1494 = vmatpush1.msra.mxu0 0.0
    %1495 = vmatprep.subr.mxu0 0.0
    %1496 = vmatpush1.msra.mxu0 0.0
    %1497 = vmatprep.subr.mxu0 0.0
    %1498 = vmatpush1.msra.mxu0 0.0
    %1499 = vmatprep.subr.mxu0 0.0
    %1500 = vmatpush1.msra.mxu0 0.0
    %1501 = vmatprep.subr.mxu0 0.0
    %1502 = vmatpush1.msra.mxu0 0.0
    %1503 = vmatprep.subr.mxu0 0.0
    %1504 = vmatpush1.msra.mxu0 0.0
    %1505 = vmatprep.subr.mxu0 0.0
    %1506 = vmatpush1.msra.mxu0 0.0
    %1507 = vmatprep.subr.mxu0 0.0
    %1508 = vmatpush1.msra.mxu0 0.0
    %1509 = vmatprep.subr.mxu0 0.0
    %1510 = vmatpush1.msra.mxu0 0.0
    %1511 = vmatprep.subr.mxu0 0.0
    %1512 = vmatpush1.msra.mxu0 0.0
    %1513 = vmatprep.subr.mxu0 0.0
    %1514 = vmatpush1.msra.mxu0 0.0
    %1515 = vmatprep.subr.mxu0 0.0
    %1516 = vmatpush1.msra.mxu0 0.0
    %1517 = vmatprep.subr.mxu0 0.0
    %1518 = vmatpush1.msra.mxu0 0.0
    %1519 = vmatprep.mubr.f32.mxu0 0.0
    %1520 = vmatmul.mubr.f32.gmra.mrb[0].mxu0 %v1434
    %v1521 = vpop.f32.mrb[0].mxu0
    %v1522 = vadd.f32 0.0, %v1521
    %v1523 = vpop.f32.mrb[0].mxu0
    %v1524 = vadd.f32 0.0, %v1523
    %1525 = vdwg.mxu0
    %1526 = vmatprep.subr.mxu0 %v74
    %1527 = vmatpush1.msra.mxu0 %v73
    %1528 = vmatprep.subr.mxu0 %v78
    %1529 = vmatpush1.msra.mxu0 %v77
    %1530 = vmatprep.subr.mxu0 %v82
    %1531 = vmatpush1.msra.mxu0 %v81
    %1532 = vmatprep.subr.mxu0 %v86
    %1533 = vmatpush1.msra.mxu0 %v85
    %1534 = vmatprep.subr.mxu0 %v90
    %1535 = vmatpush1.msra.mxu0 %v89
    %1536 = vmatprep.subr.mxu0 %v94
    %1537 = vmatpush1.msra.mxu0 %v93
    %1538 = vmatprep.subr.mxu0 %v98
    %1539 = vmatpush1.msra.mxu0 %v97
    %1540 = vmatprep.subr.mxu0 %v102
    %1541 = vmatpush1.msra.mxu0 %v101
    %1542 = vmatprep.subr.mxu0 %v106
    %1543 = vmatpush1.msra.mxu0 %v105
    %1544 = vmatprep.subr.mxu0 %v110
    %1545 = vmatpush1.msra.mxu0 %v109
    %1546 = vmatprep.subr.mxu0 %v114
    %1547 = vmatpush1.msra.mxu0 %v113
    %1548 = vmatprep.subr.mxu0 %v118
    %1549 = vmatpush1.msra.mxu0 %v117
    %1550 = vmatprep.subr.mxu0 %v122
    %1551 = vmatpush1.msra.mxu0 %v121
    %1552 = vmatprep.subr.mxu0 %v126
    %1553 = vmatpush1.msra.mxu0 %v125
    %1554 = vmatprep.subr.mxu0 %v130
    %1555 = vmatpush1.msra.mxu0 %v129
    %1556 = vmatprep.subr.mxu0 %v134
    %1557 = vmatpush1.msra.mxu0 %v133
    %1558 = vmatprep.subr.mxu0 0.0
    %1559 = vmatpush1.msra.mxu0 0.0
    %1560 = vmatprep.subr.mxu0 0.0
    %1561 = vmatpush1.msra.mxu0 0.0
    %1562 = vmatprep.subr.mxu0 0.0
    %1563 = vmatpush1.msra.mxu0 0.0
    %1564 = vmatprep.subr.mxu0 0.0
    %1565 = vmatpush1.msra.mxu0 0.0
    %1566 = vmatprep.subr.mxu0 0.0
    %1567 = vmatpush1.msra.mxu0 0.0
    %1568 = vmatprep.subr.mxu0 0.0
    %1569 = vmatpush1.msra.mxu0 0.0
    %1570 = vmatprep.subr.mxu0 0.0
    %1571 = vmatpush1.msra.mxu0 0.0
    %1572 = vmatprep.subr.mxu0 0.0
    %1573 = vmatpush1.msra.mxu0 0.0
    %1574 = vmatprep.subr.mxu0 0.0
    %1575 = vmatpush1.msra.mxu0 0.0
    %1576 = vmatprep.subr.mxu0 0.0
    %1577 = vmatpush1.msra.mxu0 0.0
    %1578 = vmatprep.subr.mxu0 0.0
    %1579 = vmatpush1.msra.mxu0 0.0
    %1580 = vmatprep.subr.mxu0 0.0
    %1581 = vmatpush1.msra.mxu0 0.0
    %1582 = vmatprep.subr.mxu0 0.0
    %1583 = vmatpush1.msra.mxu0 0.0
    %1584 = vmatprep.subr.mxu0 0.0
    %1585 = vmatpush1.msra.mxu0 0.0
    %1586 = vmatprep.subr.mxu0 0.0
    %1587 = vmatpush1.msra.mxu0 0.0
    %1588 = vmatprep.subr.mxu0 0.0
    %1589 = vmatpush1.msra.mxu0 0.0
    %1590 = vmatprep.mubr.f32.mxu0 0.0
    %1591 = vmatmul.mubr.f32.gmra.mrb[0].mxu0 %v1434
    %v1592 = vpop.f32.mrb[0].mxu0
    %v1593 = vadd.f32 0.0, %v1592
    %v1594 = vpop.f32.mrb[0].mxu0
    %v1595 = vadd.f32 0.0, %v1594
    %1596 = vdwg.mxu0
    %v1597 = vadd.f32 %v1451, %v1522
    %v1598 = vadd.f32 %v1452, %v1524
    %v1599 = vadd.f32 %v1453, %v1593
    %v1600 = vadd.f32 %v1454, %v1595
    %v1601 = vmul.f32 %v1597, 0.5
    %v1602 = vmul.f32 %v1598, 0.5
    %v1603 = vmul.f32 %v1599, 0.5
    %v1604 = vtanh.pop %v1601
    %v1605 = vtanh.pop %v1602
    %v1606 = vtanh.pop %v1603
    %v1607 = vmul.f32 %v1604, 0.5
    %v1608 = vmul.f32 %v1605, 0.5
    %v1609 = vmul.f32 %v1606, 0.5
    %v1610 = vadd.f32 %v1607, 0.5
    %v1611 = vadd.f32 %v1608, 0.5
    %v1612 = vadd.f32 %v1609, 0.5
    %v1613 = vtanh.pop %v1600
    %v1614 = vmul.f32 %v1611, %v1432
    %v1615 = vmul.f32 %v1610, %v1613
    %v1616 = vadd.f32 %v1614, %v1615
    %v1617 = vtanh.pop %v1616
    %v1618 = vmul.f32 %v1612, %v1617
    %s1619 = sadd.s32 %s135, 8
    %v1620 = vstv %s1619
    %vm1621 = vcmp.eq.s32.totalorder %v69, %v1620
    %v1622 = vld [vmem:[#allocation4] sm:$0xff]
    %v1623 = vsel %vm1621, 1, 0
    %1624 = vset.pattern.permute.xlu0 0
    %1625 = vperm.xlu0 %1624, %v1623
    %v1626 = vpop.permute.xlu0 %1625
    %vm1627 = vcmp.eq.s32.totalorder %v1626, 1
    %v1628 = vsel %vm1627, %v1618, %v1622
    %1629 = vst [vmem:[#allocation4] sm:$0xff] %v1628
    %1630 = vst [vmem:[#allocation2] sm:$0xff] %v1618
    %1631 = vst [vmem:[#allocation3] sm:$0xff] %v1616
    // Predicated region
    $region38: #{tpu_custom_call.1} parent=1 // pred_check
      %p1632 = pneg %p62
    $region39: #{tpu_custom_call.1} parent=1 // pred_check_branch
      %1634 = sbr.rel (%p1632) target = $region41
    $region40: #{tpu_custom_call.1} parent=1 // pred_region
      %v1635 = vld [vmem:[#allocation4] sm:$0xff]
      %v1636 = vld [vmem:[#allocation10] sm:$0xff]
      %v1637 = vld [vmem:[#allocation10 + $0x8] sm:$0xff]
      %v1638 = vld [vmem:[#allocation10 + $0x10] sm:$0xff]
      %v1639 = vld [vmem:[#allocation10 + $0x18] sm:$0xff]
      %v1640 = vld [vmem:[#allocation10 + $0x20] sm:$0xff]
      %v1641 = vld [vmem:[#allocation10 + $0x28] sm:$0xff]
      %v1642 = vld [vmem:[#allocation10 + $0x30] sm:$0xff]
      %v1643 = vld [vmem:[#allocation10 + $0x38] sm:$0xff]
      %v1644 = vld [vmem:[#allocation10 + $0x40] sm:$0xff]
      %v1645 = vld [vmem:[#allocation10 + $0x48] sm:$0xff]
      %v1646 = vld [vmem:[#allocation10 + $0x50] sm:$0xff]
      %v1647 = vld [vmem:[#allocation10 + $0x58] sm:$0xff]
      %v1648 = vld [vmem:[#allocation10 + $0x60] sm:$0xff]
      %v1649 = vld [vmem:[#allocation10 + $0x68] sm:$0xff]
      %v1650 = vld [vmem:[#allocation10 + $0x70] sm:$0xff]
      %v1651 = vld [vmem:[#allocation10 + $0x78] sm:$0xff]
      %1652 = vmatprep.subr.mxu0 0.0
      %1653 = vmatpush1.msra.mxu0 %v1636
      %1654 = vmatprep.subr.mxu0 0.0
      %1655 = vmatpush1.msra.mxu0 %v1637
      %1656 = vmatprep.subr.mxu0 0.0
      %1657 = vmatpush1.msra.mxu0 %v1638
      %1658 = vmatprep.subr.mxu0 0.0
      %1659 = vmatpush1.msra.mxu0 %v1639
      %1660 = vmatprep.subr.mxu0 0.0
      %1661 = vmatpush1.msra.mxu0 %v1640
      %1662 = vmatprep.subr.mxu0 0.0
      %1663 = vmatpush1.msra.mxu0 %v1641
      %1664 = vmatprep.subr.mxu0 0.0
      %1665 = vmatpush1.msra.mxu0 %v1642
      %1666 = vmatprep.subr.mxu0 0.0
      %1667 = vmatpush1.msra.mxu0 %v1643
      %1668 = vmatprep.subr.mxu0 0.0
      %1669 = vmatpush1.msra.mxu0 %v1644
      %1670 = vmatprep.subr.mxu0 0.0
      %1671 = vmatpush1.msra.mxu0 %v1645
      %1672 = vmatprep.subr.mxu0 0.0
      %1673 = vmatpush1.msra.mxu0 %v1646
      %1674 = vmatprep.subr.mxu0 0.0
      %1675 = vmatpush1.msra.mxu0 %v1647
      %1676 = vmatprep.subr.mxu0 0.0
      %1677 = vmatpush1.msra.mxu0 %v1648
      %1678 = vmatprep.subr.mxu0 0.0
      %1679 = vmatpush1.msra.mxu0 %v1649
      %1680 = vmatprep.subr.mxu0 0.0
      %1681 = vmatpush1.msra.mxu0 %v1650
      %1682 = vmatprep.subr.mxu0 0.0
      %1683 = vmatpush1.msra.mxu0 %v1651
      %1684 = vmatprep.subr.mxu0 0.0
      %1685 = vmatpush1.msra.mxu0 0.0
      %1686 = vmatprep.subr.mxu0 0.0
      %1687 = vmatpush1.msra.mxu0 0.0
      %1688 = vmatprep.subr.mxu0 0.0
      %1689 = vmatpush1.msra.mxu0 0.0
      %1690 = vmatprep.subr.mxu0 0.0
      %1691 = vmatpush1.msra.mxu0 0.0
      %1692 = vmatprep.subr.mxu0 0.0
      %1693 = vmatpush1.msra.mxu0 0.0
      %1694 = vmatprep.subr.mxu0 0.0
      %1695 = vmatpush1.msra.mxu0 0.0
      %1696 = vmatprep.subr.mxu0 0.0
      %1697 = vmatpush1.msra.mxu0 0.0
      %1698 = vmatprep.subr.mxu0 0.0
      %1699 = vmatpush1.msra.mxu0 0.0
      %1700 = vmatprep.subr.mxu0 0.0
      %1701 = vmatpush1.msra.mxu0 0.0
      %1702 = vmatprep.subr.mxu0 0.0
      %1703 = vmatpush1.msra.mxu0 0.0
      %1704 = vmatprep.subr.mxu0 0.0
      %1705 = vmatpush1.msra.mxu0 0.0
      %1706 = vmatprep.subr.mxu0 0.0
      %1707 = vmatpush1.msra.mxu0 0.0
      %1708 = vmatprep.subr.mxu0 0.0
      %1709 = vmatpush1.msra.mxu0 0.0
      %1710 = vmatprep.subr.mxu0 0.0
      %1711 = vmatpush1.msra.mxu0 0.0
      %1712 = vmatprep.subr.mxu0 0.0
      %1713 = vmatpush1.msra.mxu0 0.0
      %1714 = vmatprep.subr.mxu0 0.0
      %1715 = vmatpush1.msra.mxu0 0.0
      %1716 = vmatprep.mubr.f32.mxu0 0.0
      %1717 = vmatmul.mubr.f32.gmra.mrb[0].mxu0 %v1635
      %v1718 = vpop.f32.mrb[0].mxu0
      %v1719 = vadd.f32 0.0, %v1718
      %v1720 = vpop.f32.mrb[0].mxu0
      %1721 = vdwg.mxu0
      %1722 = vst [vmem:[#allocation11] sm:$0xff] %v1719
    $region41: #{tpu_custom_call.1} parent=1 // pred_fallthru
      _
    // Predicated region
    $region42: #{tpu_custom_call.1} parent=1 // pred_check
      _
    $region43: #{tpu_custom_call.1} parent=1 // pred_check_branch
      %1724 = sbr.rel (0) target = $region45
    $region44: #{tpu_custom_call.1} parent=1 // pred_region
      %s1726 = ssub.s32 128, 128
      %1727 = vsyncadd [#allocation7], %s1726
      %s1729 = sshll.u32 [#allocation11], 4
      %s1730 = int_to_ptr.vmem [resolvable:$true] %s1729
      %1732 = dma.vmem_to_hbm [thread:$0]  %s1730, 128, %s5, [#allocation7]
    $region45: #{tpu_custom_call.1} parent=1 // pred_fallthru
      _
    // Predicated region
    $region46: #{tpu_custom_call.1} parent=1 // pred_check
      _
    $region47: #{tpu_custom_call.1} parent=1 // pred_check_branch
      %1734 = sbr.rel (0) target = $region49
    $region48: #{tpu_custom_call.1} parent=1 // pred_region
      %1735 = dma.done [#allocation7], 128
    $region49: #{tpu_custom_call.1} parent=1 // pred_fallthru
      _
    %1736 = vsyncpa [#allocation6], 1
    %1737 = vsyncpa [#allocation9], 1
    %1738 = vsyncpa [#allocation7], 1

</llo_original>
